<compile_context>
chip_gen: v7x
topology: tpu7x:2x2x1
jax: 0.10.0
libtpu: 0.0.40
codegen_flags: <defaults>
</compile_context>

<pallas_src>
import functools

import jax
import jax.numpy as jnp
from jax.experimental import pallas as pl
from jax.experimental.pallas import tpu as pltpu


def lstnet_kernel(
    xcol_ref,     # (B*T, K*D_in) f32  im2col'ed padded input (tap-major, chan-minor)
    convw_ref,    # (K*D_in, H)   bf16 conv weight matching im2col column order
    convb_ref,    # (1, H)        f32
    w_ih_ref,     # (H, 3H)       bf16 [W_ir | W_iz | W_in].T  (gate-fused)
    w_hh_ref,     # (H, 3H)       bf16 [W_hr | W_hz | W_hn].T  (gate-fused)
    b_i_ref,      # (1, 3H)       f32  b_ih + [b_hr, b_hz, 0]  (folded)
    b_hn_ref,     # (1, H)        f32
    wqkv_ref,     # (H, 3*n_head*dk) bf16 fused [Wq | Wk | Wv].T (head-major blocks)
    fc_ref,       # (n_head*dv, H) bf16 fc.weight.T
    ln_g_ref,     # (1, H)        f32  LayerNorm gamma
    ln_b_ref,     # (1, H)        f32  LayerNorm beta
    linw_ref,     # (H, 1)        f32  final Linear weight.T
    linb_ref,     # (1, 1)        f32
    out_ref,      # (B, 1)        f32
    *, B, T, H, n_head,
):
    f32 = jnp.float32
    bf16 = jnp.bfloat16

    # ---------------- Conv1d (padding=K//2, bias) + ReLU: one matmul --------
    conv_flat = jnp.maximum(
        jnp.dot(xcol_ref[...].astype(bf16), convw_ref[...],
                preferred_element_type=f32) + convb_ref[...], 0.0)     # (B*T, H)
    # dropout: eval mode -> identity

    # ---------------- GRU (seq axis = dim0, batch = dim1, as in PyTorch) ----
    # Hoisted gate-fused input projection; b_hr/b_hz already folded into bias.
    gi = (jnp.dot(conv_flat.astype(bf16), w_ih_ref[...],
                  preferred_element_type=f32)
          + b_i_ref[...]).reshape(B, T, 3 * H)                         # (B, T, 3H)
    w_hh = w_hh_ref[...]                                               # (H, 3H) bf16
    b_hn = jnp.broadcast_to(b_hn_ref[...], (T, H))                     # hoisted bcast

    h = jnp.zeros((T, H), f32)
    hs = []
    for t in range(B):                               # B "time" steps, unrolled
        gh = jnp.dot(h.astype(bf16), w_hh, preferred_element_type=f32)  # (T, 3H)
        rz = jax.nn.sigmoid(gi[t, :, :2 * H] + gh[:, :2 * H])           # fused r|z
        r = rz[:, :H]
        z = rz[:, H:]
        n = jnp.tanh(gi[t, :, 2 * H:] + r * (gh[:, 2 * H:] + b_hn))
        h = (1.0 - z) * n + z * h
        hs.append(h)                                 # stays in vregs (B is tiny)
    g = jnp.stack(hs, axis=0)                        # (B, T, H)
    g2 = g.reshape(B * T, H)
    # dropout: eval mode -> identity

    # ---------------- Multi-head self-attention + residual + LayerNorm ------
    dk = H                                           # d_k = d_v = hidden_dim
    inv_temp = 1.0 / (float(dk) ** 0.5)
    HD = n_head * dk

    qkv = jnp.dot(g2.astype(bf16), wqkv_ref[...],
                  preferred_element_type=f32)        # (B*T, 3*n_head*dk) lane-dense
    q_all = qkv[:, :HD].reshape(B, T, HD)
    k_all = qkv[:, HD:2 * HD].reshape(B, T, HD)
    v_all = qkv[:, 2 * HD:].reshape(B, T, HD)

    ctx_heads = []
    for hd in range(n_head):                         # static lane slices per head
        lo = hd * dk
        qh = q_all[:, :, lo:lo + dk].astype(bf16)
        kh = k_all[:, :, lo:lo + dk].astype(bf16)
        vh = v_all[:, :, lo:lo + dk].astype(bf16)
        s = jnp.einsum('bqd,bkd->bqk', qh, kh,
                       preferred_element_type=f32) * inv_temp          # (B, T, T)
        s = s - jnp.max(s, axis=-1, keepdims=True)
        p = jnp.exp(s)
        attn = p * pl.reciprocal(jnp.sum(p, axis=-1, keepdims=True), approx=True)
        ctx_heads.append(jnp.einsum('bqk,bkd->bqd', attn.astype(bf16), vh,
                                    preferred_element_type=f32))       # (B, T, dv)
    ctx = jnp.concatenate(ctx_heads, axis=-1)        # (B, T, n_head*dv) head-major
    proj = jnp.dot(ctx.reshape(B * T, HD).astype(bf16), fc_ref[...],
                   preferred_element_type=f32)       # (B*T, H): one deep matmul
    # attention / fc dropout: eval mode -> identity

    y = proj.reshape(B, T, H) + g                    # residual
    # TODO(synk): MultiHeadAttention source not given; assuming bias-free
    #             q/k/v/fc projections and LayerNorm eps=1e-6 (annotated-
    #             transformer style).  torch.nn.LayerNorm default is 1e-5.
    mu = jnp.mean(y, axis=-1, keepdims=True)
    var = jnp.mean((y - mu) ** 2, axis=-1, keepdims=True)
    y = (y - mu) * jax.lax.rsqrt(var + 1e-6)
    y = y * ln_g_ref[...][None, :, :] + ln_b_ref[...][None, :, :]

    # ---------------- final Linear on the last timestep ---------------------
    last = y[:, T - 1, :]                            # (B, H)
    out_ref[...] = jnp.dot(last, linw_ref[...],
                           preferred_element_type=f32) + linb_ref[...]


def lstnet_forward(x, params):
    """x: (B, T, D_in) float32  ->  (B,) float32 (squeezed, as in the module)."""
    B, T, D_in = x.shape
    H = params['H']
    K = params['K']
    n_head = params['n_head']
    assert K % 2 == 1, "im2col only matches Conv1d(padding=K//2) for odd K"
    pad = K // 2

    # im2col in XLA: columns ordered tap-major, channel-minor -> (B*T, K*D_in)
    x_pad = jnp.pad(x, ((0, 0), (pad, pad), (0, 0)))
    x_col = jnp.concatenate([x_pad[:, k:k + T, :] for k in range(K)], axis=-1)
    x_col = x_col.reshape(B * T, K * D_in)

    kern = functools.partial(lstnet_kernel, B=B, T=T, H=H, n_head=n_head)
    vmem = pl.BlockSpec(memory_space=pltpu.MemorySpace.VMEM)
    args = (
        x_col,
        params['conv_w'], params['conv_b'],
        params['gru_w_ih'], params['gru_w_hh'],
        params['gru_b_i'], params['gru_b_hn'],
        params['wqkv'], params['fc'],
        params['ln_g'], params['ln_b'],
        params['lin_w'], params['lin_b'],
    )
    out = pl.pallas_call(
        kern,
        out_shape=jax.ShapeDtypeStruct((B, 1), jnp.float32),
        in_specs=[vmem] * len(args),
        out_specs=vmem,
        # Explicit VMEM budget (all-resident, gridless design).  Fine at these
        # toy shapes; re-derive (or grid/pipeline) before scaling on v7x.
        compiler_params=pltpu.CompilerParams(vmem_limit_bytes=32 * 1024 * 1024),
    )(*args)
    return jnp.squeeze(out)                          # .squeeze() as in PyTorch


def init_params(key, D_in, H, K, n_head):
    """Deterministic synthetic parameters; generated in PyTorch shapes then
    converted to the kernel's fused, MXU-friendly (bf16) layouts."""
    ks = jax.random.split(key, 12)
    s = 0.1
    bf16 = jnp.bfloat16

    # Conv1d(D_in, H, K): weight (H, D_in, K) -> (K, D_in, H) -> (K*D_in, H)
    conv_w_pt = jax.random.normal(ks[0], (H, D_in, K), jnp.float32) * s
    conv_w = jnp.transpose(conv_w_pt, (2, 1, 0)).reshape(K * D_in, H).astype(bf16)
    conv_b = jax.random.normal(ks[1], (1, H), jnp.float32) * s

    # GRU(H, H): weight_ih/hh (3H, H) with gate order (r, z, n).
    # Fused layouts: W.T -> (H, 3H) with column blocks [W_*r.T | W_*z.T | W_*n.T].
    w_ih_pt = jax.random.normal(ks[2], (3 * H, H), jnp.float32) * s
    w_hh_pt = jax.random.normal(ks[3], (3 * H, H), jnp.float32) * s
    gru_w_ih = w_ih_pt.T.astype(bf16)                # (H, 3H)
    gru_w_hh = w_hh_pt.T.astype(bf16)                # (H, 3H)
    b_ih_pt = jax.random.normal(ks[4], (3 * H,), jnp.float32) * s
    b_hh_pt = jax.random.normal(ks[5], (3 * H,), jnp.float32) * s
    # Fold b_hr, b_hz into the hoisted input-projection bias; keep b_hn apart.
    b_fold = b_ih_pt + jnp.concatenate(
        [b_hh_pt[:2 * H], jnp.zeros((H,), jnp.float32)])
    gru_b_i = b_fold.reshape(1, 3 * H)
    gru_b_hn = b_hh_pt[2 * H:].reshape(1, H)

    # MultiHeadAttention(n_head, H, d_k=H, d_v=H):
    #   w_{q,k,v} PyTorch Linear weights (n_head*dk, H); fused QKV weight
    #   = [Wq.T | Wk.T | Wv.T] -> (H, 3*n_head*dk), head-major inside each block.
    wq_pt = jax.random.normal(ks[6], (n_head * H, H), jnp.float32) * s
    wk_pt = jax.random.normal(ks[7], (n_head * H, H), jnp.float32) * s
    wv_pt = jax.random.normal(ks[8], (n_head * H, H), jnp.float32) * s
    wqkv = jnp.concatenate([wq_pt.T, wk_pt.T, wv_pt.T], axis=1).astype(bf16)
    #   fc PyTorch Linear weight (H, n_head*dv) -> fc.T (n_head*dv, H)
    fc_pt = jax.random.normal(ks[9], (H, n_head * H), jnp.float32) * s
    fc = fc_pt.T.astype(bf16)

    ln_g = jnp.ones((1, H), jnp.float32)
    ln_b = jnp.zeros((1, H), jnp.float32)

    # Linear(H, 1): weight (1, H) -> (H, 1); bias (1,) -> (1, 1)
    lin_w = (jax.random.normal(ks[10], (1, H), jnp.float32) * s).T
    lin_b = jax.random.normal(ks[11], (1, 1), jnp.float32) * s

    return dict(H=H, K=K, n_head=n_head,
                conv_w=conv_w, conv_b=conv_b,
                gru_w_ih=gru_w_ih, gru_w_hh=gru_w_hh,
                gru_b_i=gru_b_i, gru_b_hn=gru_b_hn,
                wqkv=wqkv, fc=fc,
                ln_g=ln_g, ln_b=ln_b, lin_w=lin_w, lin_b=lin_b)


if __name__ == "__main__":
    # Small shapes implied by the forward pass: x is (batch, win_size, input_dim).
    B, T, D_in = 2, 8, 4
    H, K, n_head = 32, 3, 4

    key = jax.random.PRNGKey(0)
    k_x, k_p = jax.random.split(key)
    x = jax.random.normal(k_x, (B, T, D_in), jnp.float32)
    params = init_params(k_p, D_in, H, K, n_head)

    out = lstnet_forward(x, params)
    out = jax.block_until_ready(out)
    assert out.shape == (B,), out.shape
    assert bool(jnp.all(jnp.isfinite(out)))
    print("KERNEL_OK")
</pallas_src>

<mosaic_0001>
module attributes {stable_mosaic.version = 11 : i64} {
  func.func @lstnet_kernel(%arg0: memref<16x12xf32, #tpu.memory_space<vmem>>, %arg1: memref<12x32xbf16, #tpu.memory_space<vmem>>, %arg2: memref<1x32xf32, #tpu.memory_space<vmem>>, %arg3: memref<32x96xbf16, #tpu.memory_space<vmem>>, %arg4: memref<32x96xbf16, #tpu.memory_space<vmem>>, %arg5: memref<1x96xf32, #tpu.memory_space<vmem>>, %arg6: memref<1x32xf32, #tpu.memory_space<vmem>>, %arg7: memref<32x384xbf16, #tpu.memory_space<vmem>>, %arg8: memref<128x32xbf16, #tpu.memory_space<vmem>>, %arg9: memref<1x32xf32, #tpu.memory_space<vmem>>, %arg10: memref<1x32xf32, #tpu.memory_space<vmem>>, %arg11: memref<32x1xf32, #tpu.memory_space<vmem>>, %arg12: memref<1x1xf32, #tpu.memory_space<vmem>>, %arg13: memref<2x1xf32, #tpu.memory_space<vmem>>) attributes {dimension_semantics = [], scalar_prefetch = 0 : i64, scratch_operands = 0 : i64, tpu.core_type = #tpu.core_type<tc>} {
    %c0 = arith.constant 0 : index
    %c0_0 = arith.constant 0 : index
    %0 = vector.load %arg0[%c0, %c0_0] : memref<16x12xf32, #tpu.memory_space<vmem>>, vector<16x12xf32>
    %1 = arith.truncf %0 : vector<16x12xf32> to vector<16x12xbf16>
    %c0_1 = arith.constant 0 : index
    %c0_2 = arith.constant 0 : index
    %2 = vector.load %arg1[%c0_1, %c0_2] : memref<12x32xbf16, #tpu.memory_space<vmem>>, vector<12x32xbf16>
    %cst = arith.constant dense<0.000000e+00> : vector<16x32xf32>
    %3 = tpu.matmul %1, %2, %cst {dimension_numbers = #tpu.dot_dimension_numbers<[1], [0], [0], [1], [0, 0, 1, 1], [], []>} : vector<16x12xbf16>, vector<12x32xbf16>, vector<16x32xf32> -> vector<16x32xf32>
    %c0_3 = arith.constant 0 : index
    %c0_4 = arith.constant 0 : index
    %4 = vector.load %arg2[%c0_3, %c0_4] : memref<1x32xf32, #tpu.memory_space<vmem>>, vector<1x32xf32>
    %5 = vector.broadcast %4 : vector<1x32xf32> to vector<16x32xf32>
    %6 = arith.addf %3, %5 : vector<16x32xf32>
    %cst_5 = arith.constant 0.000000e+00 : f32
    %7 = vector.broadcast %cst_5 : f32 to vector<16x32xf32>
    %8 = arith.maximumf %6, %7 : vector<16x32xf32>
    %9 = arith.truncf %8 : vector<16x32xf32> to vector<16x32xbf16>
    %c0_6 = arith.constant 0 : index
    %c0_7 = arith.constant 0 : index
    %10 = vector.load %arg3[%c0_6, %c0_7] : memref<32x96xbf16, #tpu.memory_space<vmem>>, vector<32x96xbf16>
    %cst_8 = arith.constant dense<0.000000e+00> : vector<16x96xf32>
    %11 = tpu.matmul %9, %10, %cst_8 {dimension_numbers = #tpu.dot_dimension_numbers<[1], [0], [0], [1], [0, 0, 1, 1], [], []>} : vector<16x32xbf16>, vector<32x96xbf16>, vector<16x96xf32> -> vector<16x96xf32>
    %c0_9 = arith.constant 0 : index
    %c0_10 = arith.constant 0 : index
    %12 = vector.load %arg5[%c0_9, %c0_10] : memref<1x96xf32, #tpu.memory_space<vmem>>, vector<1x96xf32>
    %13 = vector.broadcast %12 : vector<1x96xf32> to vector<16x96xf32>
    %14 = arith.addf %11, %13 : vector<16x96xf32>
    %15 = vector.shape_cast %14 : vector<16x96xf32> to vector<2x8x96xf32>
    %c0_11 = arith.constant 0 : index
    %c0_12 = arith.constant 0 : index
    %16 = vector.load %arg4[%c0_11, %c0_12] : memref<32x96xbf16, #tpu.memory_space<vmem>>, vector<32x96xbf16>
    %c0_13 = arith.constant 0 : index
    %c0_14 = arith.constant 0 : index
    %17 = vector.load %arg6[%c0_13, %c0_14] : memref<1x32xf32, #tpu.memory_space<vmem>>, vector<1x32xf32>
    %18 = vector.shape_cast %17 : vector<1x32xf32> to vector<1x32xf32>
    %19 = vector.broadcast %18 : vector<1x32xf32> to vector<8x32xf32>
    %cst_15 = arith.constant 0.000000e+00 : f32
    %20 = vector.broadcast %cst_15 : f32 to vector<8x32xf32>
    %21 = arith.truncf %20 : vector<8x32xf32> to vector<8x32xbf16>
    %cst_16 = arith.constant dense<0.000000e+00> : vector<8x96xf32>
    %22 = tpu.matmul %21, %16, %cst_16 {dimension_numbers = #tpu.dot_dimension_numbers<[1], [0], [0], [1], [0, 0, 1, 1], [], []>} : vector<8x32xbf16>, vector<32x96xbf16>, vector<8x96xf32> -> vector<8x96xf32>
    %23 = vector.extract_strided_slice %15 {offsets = [0, 0, 0], sizes = [1, 8, 64], strides = [1, 1, 1]} : vector<2x8x96xf32> to vector<1x8x64xf32>
    %24 = vector.shape_cast %23 : vector<1x8x64xf32> to vector<8x64xf32>
    %25 = vector.extract_strided_slice %22 {offsets = [0, 0], sizes = [8, 64], strides = [1, 1]} : vector<8x96xf32> to vector<8x64xf32>
    %26 = arith.addf %24, %25 : vector<8x64xf32>
    %27 = arith.negf %26 : vector<8x64xf32>
    %28 = math.exp %27 : vector<8x64xf32>
    %cst_17 = arith.constant 1.000000e+00 : f32
    %29 = vector.broadcast %cst_17 : f32 to vector<8x64xf32>
    %30 = arith.addf %29, %28 : vector<8x64xf32>
    %31 = arith.divf %29, %30 : vector<8x64xf32>
    %32 = vector.extract_strided_slice %31 {offsets = [0, 0], sizes = [8, 32], strides = [1, 1]} : vector<8x64xf32> to vector<8x32xf32>
    %33 = vector.extract_strided_slice %31 {offsets = [0, 32], sizes = [8, 32], strides = [1, 1]} : vector<8x64xf32> to vector<8x32xf32>
    %34 = vector.extract_strided_slice %15 {offsets = [0, 0, 64], sizes = [1, 8, 32], strides = [1, 1, 1]} : vector<2x8x96xf32> to vector<1x8x32xf32>
    %35 = vector.shape_cast %34 : vector<1x8x32xf32> to vector<8x32xf32>
    %36 = vector.extract_strided_slice %22 {offsets = [0, 64], sizes = [8, 32], strides = [1, 1]} : vector<8x96xf32> to vector<8x32xf32>
    %37 = arith.addf %36, %19 : vector<8x32xf32>
    %38 = arith.mulf %32, %37 : vector<8x32xf32>
    %39 = arith.addf %35, %38 : vector<8x32xf32>
    %40 = math.tanh %39 : vector<8x32xf32>
    %cst_18 = arith.constant 1.000000e+00 : f32
    %41 = vector.broadcast %cst_18 : f32 to vector<8x32xf32>
    %42 = arith.subf %41, %33 : vector<8x32xf32>
    %43 = arith.mulf %42, %40 : vector<8x32xf32>
    %44 = arith.mulf %33, %20 : vector<8x32xf32>
    %45 = arith.addf %43, %44 : vector<8x32xf32>
    %46 = arith.truncf %45 : vector<8x32xf32> to vector<8x32xbf16>
    %cst_19 = arith.constant dense<0.000000e+00> : vector<8x96xf32>
    %47 = tpu.matmul %46, %16, %cst_19 {dimension_numbers = #tpu.dot_dimension_numbers<[1], [0], [0], [1], [0, 0, 1, 1], [], []>} : vector<8x32xbf16>, vector<32x96xbf16>, vector<8x96xf32> -> vector<8x96xf32>
    %48 = vector.extract_strided_slice %15 {offsets = [1, 0, 0], sizes = [1, 8, 64], strides = [1, 1, 1]} : vector<2x8x96xf32> to vector<1x8x64xf32>
    %49 = vector.shape_cast %48 : vector<1x8x64xf32> to vector<8x64xf32>
    %50 = vector.extract_strided_slice %47 {offsets = [0, 0], sizes = [8, 64], strides = [1, 1]} : vector<8x96xf32> to vector<8x64xf32>
    %51 = arith.addf %49, %50 : vector<8x64xf32>
    %52 = arith.negf %51 : vector<8x64xf32>
    %53 = math.exp %52 : vector<8x64xf32>
    %cst_20 = arith.constant 1.000000e+00 : f32
    %54 = vector.broadcast %cst_20 : f32 to vector<8x64xf32>
    %55 = arith.addf %54, %53 : vector<8x64xf32>
    %56 = arith.divf %54, %55 : vector<8x64xf32>
    %57 = vector.extract_strided_slice %56 {offsets = [0, 0], sizes = [8, 32], strides = [1, 1]} : vector<8x64xf32> to vector<8x32xf32>
    %58 = vector.extract_strided_slice %56 {offsets = [0, 32], sizes = [8, 32], strides = [1, 1]} : vector<8x64xf32> to vector<8x32xf32>
    %59 = vector.extract_strided_slice %15 {offsets = [1, 0, 64], sizes = [1, 8, 32], strides = [1, 1, 1]} : vector<2x8x96xf32> to vector<1x8x32xf32>
    %60 = vector.shape_cast %59 : vector<1x8x32xf32> to vector<8x32xf32>
    %61 = vector.extract_strided_slice %47 {offsets = [0, 64], sizes = [8, 32], strides = [1, 1]} : vector<8x96xf32> to vector<8x32xf32>
    %62 = arith.addf %61, %19 : vector<8x32xf32>
    %63 = arith.mulf %57, %62 : vector<8x32xf32>
    %64 = arith.addf %60, %63 : vector<8x32xf32>
    %65 = math.tanh %64 : vector<8x32xf32>
    %cst_21 = arith.constant 1.000000e+00 : f32
    %66 = vector.broadcast %cst_21 : f32 to vector<8x32xf32>
    %67 = arith.subf %66, %58 : vector<8x32xf32>
    %68 = arith.mulf %67, %65 : vector<8x32xf32>
    %69 = arith.mulf %58, %45 : vector<8x32xf32>
    %70 = arith.addf %68, %69 : vector<8x32xf32>
    %71 = vector.shape_cast %45 : vector<8x32xf32> to vector<1x8x32xf32>
    %72 = vector.shape_cast %70 : vector<8x32xf32> to vector<1x8x32xf32>
    %73 = tpu.concatenate %71, %72 in 0 : vector<1x8x32xf32>, vector<1x8x32xf32> -> vector<2x8x32xf32>
    %74 = vector.shape_cast %73 : vector<2x8x32xf32> to vector<16x32xf32>
    %75 = arith.truncf %74 : vector<16x32xf32> to vector<16x32xbf16>
    %c0_22 = arith.constant 0 : index
    %c0_23 = arith.constant 0 : index
    %76 = vector.load %arg7[%c0_22, %c0_23] : memref<32x384xbf16, #tpu.memory_space<vmem>>, vector<32x384xbf16>
    %cst_24 = arith.constant dense<0.000000e+00> : vector<16x384xf32>
    %77 = tpu.matmul %75, %76, %cst_24 {dimension_numbers = #tpu.dot_dimension_numbers<[1], [0], [0], [1], [0, 0, 1, 1], [], []>} : vector<16x32xbf16>, vector<32x384xbf16>, vector<16x384xf32> -> vector<16x384xf32>
    %78 = vector.extract_strided_slice %77 {offsets = [0, 0], sizes = [16, 128], strides = [1, 1]} : vector<16x384xf32> to vector<16x128xf32>
    %79 = vector.shape_cast %78 : vector<16x128xf32> to vector<2x8x128xf32>
    %80 = vector.extract_strided_slice %77 {offsets = [0, 128], sizes = [16, 128], strides = [1, 1]} : vector<16x384xf32> to vector<16x128xf32>
    %81 = vector.shape_cast %80 : vector<16x128xf32> to vector<2x8x128xf32>
    %82 = vector.extract_strided_slice %77 {offsets = [0, 256], sizes = [16, 128], strides = [1, 1]} : vector<16x384xf32> to vector<16x128xf32>
    %83 = vector.shape_cast %82 : vector<16x128xf32> to vector<2x8x128xf32>
    %84 = vector.extract_strided_slice %79 {offsets = [0, 0, 0], sizes = [2, 8, 32], strides = [1, 1, 1]} : vector<2x8x128xf32> to vector<2x8x32xf32>
    %85 = arith.truncf %84 : vector<2x8x32xf32> to vector<2x8x32xbf16>
    %86 = vector.extract_strided_slice %81 {offsets = [0, 0, 0], sizes = [2, 8, 32], strides = [1, 1, 1]} : vector<2x8x128xf32> to vector<2x8x32xf32>
    %87 = arith.truncf %86 : vector<2x8x32xf32> to vector<2x8x32xbf16>
    %88 = vector.extract_strided_slice %83 {offsets = [0, 0, 0], sizes = [2, 8, 32], strides = [1, 1, 1]} : vector<2x8x128xf32> to vector<2x8x32xf32>
    %89 = arith.truncf %88 : vector<2x8x32xf32> to vector<2x8x32xbf16>
    "tpu.trace_start"() <{level = 10 : i32, message = "bqd,bkd->bqk"}> : () -> ()
    %cst_25 = arith.constant dense<0.000000e+00> : vector<2x8x8xf32>
    %90 = tpu.matmul %85, %87, %cst_25 {dimension_numbers = #tpu.dot_dimension_numbers<[2], [2], [1], [1], [0, 0, 0, 1, 1, 1], [0], [0]>} : vector<2x8x32xbf16>, vector<2x8x32xbf16>, vector<2x8x8xf32> -> vector<2x8x8xf32>
    "tpu.trace_stop"() : () -> ()
    %cst_26 = arith.constant 0.176776692 : f32
    %91 = vector.broadcast %cst_26 : f32 to vector<2x8x8xf32>
    %92 = arith.mulf %90, %91 : vector<2x8x8xf32>
    %cst_27 = arith.constant dense<0xFF800000> : vector<2x8xf32>
    %93 = vector.multi_reduction <maximumf>, %92, %cst_27 [2] : vector<2x8x8xf32> to vector<2x8xf32>
    %94 = vector.shape_cast %93 : vector<2x8xf32> to vector<2x8x1xf32>
    %95 = vector.broadcast %94 : vector<2x8x1xf32> to vector<2x8x8xf32>
    %96 = arith.subf %92, %95 : vector<2x8x8xf32>
    %97 = math.exp %96 : vector<2x8x8xf32>
    %cst_28 = arith.constant dense<0.000000e+00> : vector<2x8xf32>
    %98 = vector.multi_reduction <add>, %97, %cst_28 [2] : vector<2x8x8xf32> to vector<2x8xf32>
    %99 = vector.shape_cast %98 : vector<2x8xf32> to vector<2x8x1xf32>
    %100 = tpu.reciprocal %99 {approx = true} : vector<2x8x1xf32> -> vector<2x8x1xf32>
    %101 = vector.broadcast %100 : vector<2x8x1xf32> to vector<2x8x8xf32>
    %102 = arith.mulf %97, %101 : vector<2x8x8xf32>
    %103 = arith.truncf %102 : vector<2x8x8xf32> to vector<2x8x8xbf16>
    "tpu.trace_start"() <{level = 10 : i32, message = "bqk,bkd->bqd"}> : () -> ()
    %cst_29 = arith.constant dense<0.000000e+00> : vector<2x8x32xf32>
    %104 = tpu.matmul %103, %89, %cst_29 {dimension_numbers = #tpu.dot_dimension_numbers<[2], [1], [1], [2], [0, 0, 0, 1, 1, 2], [0], [0]>} : vector<2x8x8xbf16>, vector<2x8x32xbf16>, vector<2x8x32xf32> -> vector<2x8x32xf32>
    "tpu.trace_stop"() : () -> ()
    %105 = vector.extract_strided_slice %79 {offsets = [0, 0, 32], sizes = [2, 8, 32], strides = [1, 1, 1]} : vector<2x8x128xf32> to vector<2x8x32xf32>
    %106 = arith.truncf %105 : vector<2x8x32xf32> to vector<2x8x32xbf16>
    %107 = vector.extract_strided_slice %81 {offsets = [0, 0, 32], sizes = [2, 8, 32], strides = [1, 1, 1]} : vector<2x8x128xf32> to vector<2x8x32xf32>
    %108 = arith.truncf %107 : vector<2x8x32xf32> to vector<2x8x32xbf16>
    %109 = vector.extract_strided_slice %83 {offsets = [0, 0, 32], sizes = [2, 8, 32], strides = [1, 1, 1]} : vector<2x8x128xf32> to vector<2x8x32xf32>
    %110 = arith.truncf %109 : vector<2x8x32xf32> to vector<2x8x32xbf16>
    "tpu.trace_start"() <{level = 10 : i32, message = "bqd,bkd->bqk"}> : () -> ()
    %cst_30 = arith.constant dense<0.000000e+00> : vector<2x8x8xf32>
    %111 = tpu.matmul %106, %108, %cst_30 {dimension_numbers = #tpu.dot_dimension_numbers<[2], [2], [1], [1], [0, 0, 0, 1, 1, 1], [0], [0]>} : vector<2x8x32xbf16>, vector<2x8x32xbf16>, vector<2x8x8xf32> -> vector<2x8x8xf32>
    "tpu.trace_stop"() : () -> ()
    %cst_31 = arith.constant 0.176776692 : f32
    %112 = vector.broadcast %cst_31 : f32 to vector<2x8x8xf32>
    %113 = arith.mulf %111, %112 : vector<2x8x8xf32>
    %cst_32 = arith.constant dense<0xFF800000> : vector<2x8xf32>
    %114 = vector.multi_reduction <maximumf>, %113, %cst_32 [2] : vector<2x8x8xf32> to vector<2x8xf32>
    %115 = vector.shape_cast %114 : vector<2x8xf32> to vector<2x8x1xf32>
    %116 = vector.broadcast %115 : vector<2x8x1xf32> to vector<2x8x8xf32>
    %117 = arith.subf %113, %116 : vector<2x8x8xf32>
    %118 = math.exp %117 : vector<2x8x8xf32>
    %cst_33 = arith.constant dense<0.000000e+00> : vector<2x8xf32>
    %119 = vector.multi_reduction <add>, %118, %cst_33 [2] : vector<2x8x8xf32> to vector<2x8xf32>
    %120 = vector.shape_cast %119 : vector<2x8xf32> to vector<2x8x1xf32>
    %121 = tpu.reciprocal %120 {approx = true} : vector<2x8x1xf32> -> vector<2x8x1xf32>
    %122 = vector.broadcast %121 : vector<2x8x1xf32> to vector<2x8x8xf32>
    %123 = arith.mulf %118, %122 : vector<2x8x8xf32>
    %124 = arith.truncf %123 : vector<2x8x8xf32> to vector<2x8x8xbf16>
    "tpu.trace_start"() <{level = 10 : i32, message = "bqk,bkd->bqd"}> : () -> ()
    %cst_34 = arith.constant dense<0.000000e+00> : vector<2x8x32xf32>
    %125 = tpu.matmul %124, %110, %cst_34 {dimension_numbers = #tpu.dot_dimension_numbers<[2], [1], [1], [2], [0, 0, 0, 1, 1, 2], [0], [0]>} : vector<2x8x8xbf16>, vector<2x8x32xbf16>, vector<2x8x32xf32> -> vector<2x8x32xf32>
    "tpu.trace_stop"() : () -> ()
    %126 = vector.extract_strided_slice %79 {offsets = [0, 0, 64], sizes = [2, 8, 32], strides = [1, 1, 1]} : vector<2x8x128xf32> to vector<2x8x32xf32>
    %127 = arith.truncf %126 : vector<2x8x32xf32> to vector<2x8x32xbf16>
    %128 = vector.extract_strided_slice %81 {offsets = [0, 0, 64], sizes = [2, 8, 32], strides = [1, 1, 1]} : vector<2x8x128xf32> to vector<2x8x32xf32>
    %129 = arith.truncf %128 : vector<2x8x32xf32> to vector<2x8x32xbf16>
    %130 = vector.extract_strided_slice %83 {offsets = [0, 0, 64], sizes = [2, 8, 32], strides = [1, 1, 1]} : vector<2x8x128xf32> to vector<2x8x32xf32>
    %131 = arith.truncf %130 : vector<2x8x32xf32> to vector<2x8x32xbf16>
    "tpu.trace_start"() <{level = 10 : i32, message = "bqd,bkd->bqk"}> : () -> ()
    %cst_35 = arith.constant dense<0.000000e+00> : vector<2x8x8xf32>
    %132 = tpu.matmul %127, %129, %cst_35 {dimension_numbers = #tpu.dot_dimension_numbers<[2], [2], [1], [1], [0, 0, 0, 1, 1, 1], [0], [0]>} : vector<2x8x32xbf16>, vector<2x8x32xbf16>, vector<2x8x8xf32> -> vector<2x8x8xf32>
    "tpu.trace_stop"() : () -> ()
    %cst_36 = arith.constant 0.176776692 : f32
    %133 = vector.broadcast %cst_36 : f32 to vector<2x8x8xf32>
    %134 = arith.mulf %132, %133 : vector<2x8x8xf32>
    %cst_37 = arith.constant dense<0xFF800000> : vector<2x8xf32>
    %135 = vector.multi_reduction <maximumf>, %134, %cst_37 [2] : vector<2x8x8xf32> to vector<2x8xf32>
    %136 = vector.shape_cast %135 : vector<2x8xf32> to vector<2x8x1xf32>
    %137 = vector.broadcast %136 : vector<2x8x1xf32> to vector<2x8x8xf32>
    %138 = arith.subf %134, %137 : vector<2x8x8xf32>
    %139 = math.exp %138 : vector<2x8x8xf32>
    %cst_38 = arith.constant dense<0.000000e+00> : vector<2x8xf32>
    %140 = vector.multi_reduction <add>, %139, %cst_38 [2] : vector<2x8x8xf32> to vector<2x8xf32>
    %141 = vector.shape_cast %140 : vector<2x8xf32> to vector<2x8x1xf32>
    %142 = tpu.reciprocal %141 {approx = true} : vector<2x8x1xf32> -> vector<2x8x1xf32>
    %143 = vector.broadcast %142 : vector<2x8x1xf32> to vector<2x8x8xf32>
    %144 = arith.mulf %139, %143 : vector<2x8x8xf32>
    %145 = arith.truncf %144 : vector<2x8x8xf32> to vector<2x8x8xbf16>
    "tpu.trace_start"() <{level = 10 : i32, message = "bqk,bkd->bqd"}> : () -> ()
    %cst_39 = arith.constant dense<0.000000e+00> : vector<2x8x32xf32>
    %146 = tpu.matmul %145, %131, %cst_39 {dimension_numbers = #tpu.dot_dimension_numbers<[2], [1], [1], [2], [0, 0, 0, 1, 1, 2], [0], [0]>} : vector<2x8x8xbf16>, vector<2x8x32xbf16>, vector<2x8x32xf32> -> vector<2x8x32xf32>
    "tpu.trace_stop"() : () -> ()
    %147 = vector.extract_strided_slice %79 {offsets = [0, 0, 96], sizes = [2, 8, 32], strides = [1, 1, 1]} : vector<2x8x128xf32> to vector<2x8x32xf32>
    %148 = arith.truncf %147 : vector<2x8x32xf32> to vector<2x8x32xbf16>
    %149 = vector.extract_strided_slice %81 {offsets = [0, 0, 96], sizes = [2, 8, 32], strides = [1, 1, 1]} : vector<2x8x128xf32> to vector<2x8x32xf32>
    %150 = arith.truncf %149 : vector<2x8x32xf32> to vector<2x8x32xbf16>
    %151 = vector.extract_strided_slice %83 {offsets = [0, 0, 96], sizes = [2, 8, 32], strides = [1, 1, 1]} : vector<2x8x128xf32> to vector<2x8x32xf32>
    %152 = arith.truncf %151 : vector<2x8x32xf32> to vector<2x8x32xbf16>
    "tpu.trace_start"() <{level = 10 : i32, message = "bqd,bkd->bqk"}> : () -> ()
    %cst_40 = arith.constant dense<0.000000e+00> : vector<2x8x8xf32>
    %153 = tpu.matmul %148, %150, %cst_40 {dimension_numbers = #tpu.dot_dimension_numbers<[2], [2], [1], [1], [0, 0, 0, 1, 1, 1], [0], [0]>} : vector<2x8x32xbf16>, vector<2x8x32xbf16>, vector<2x8x8xf32> -> vector<2x8x8xf32>
    "tpu.trace_stop"() : () -> ()
    %cst_41 = arith.constant 0.176776692 : f32
    %154 = vector.broadcast %cst_41 : f32 to vector<2x8x8xf32>
    %155 = arith.mulf %153, %154 : vector<2x8x8xf32>
    %cst_42 = arith.constant dense<0xFF800000> : vector<2x8xf32>
    %156 = vector.multi_reduction <maximumf>, %155, %cst_42 [2] : vector<2x8x8xf32> to vector<2x8xf32>
    %157 = vector.shape_cast %156 : vector<2x8xf32> to vector<2x8x1xf32>
    %158 = vector.broadcast %157 : vector<2x8x1xf32> to vector<2x8x8xf32>
    %159 = arith.subf %155, %158 : vector<2x8x8xf32>
    %160 = math.exp %159 : vector<2x8x8xf32>
    %cst_43 = arith.constant dense<0.000000e+00> : vector<2x8xf32>
    %161 = vector.multi_reduction <add>, %160, %cst_43 [2] : vector<2x8x8xf32> to vector<2x8xf32>
    %162 = vector.shape_cast %161 : vector<2x8xf32> to vector<2x8x1xf32>
    %163 = tpu.reciprocal %162 {approx = true} : vector<2x8x1xf32> -> vector<2x8x1xf32>
    %164 = vector.broadcast %163 : vector<2x8x1xf32> to vector<2x8x8xf32>
    %165 = arith.mulf %160, %164 : vector<2x8x8xf32>
    %166 = arith.truncf %165 : vector<2x8x8xf32> to vector<2x8x8xbf16>
    "tpu.trace_start"() <{level = 10 : i32, message = "bqk,bkd->bqd"}> : () -> ()
    %cst_44 = arith.constant dense<0.000000e+00> : vector<2x8x32xf32>
    %167 = tpu.matmul %166, %152, %cst_44 {dimension_numbers = #tpu.dot_dimension_numbers<[2], [1], [1], [2], [0, 0, 0, 1, 1, 2], [0], [0]>} : vector<2x8x8xbf16>, vector<2x8x32xbf16>, vector<2x8x32xf32> -> vector<2x8x32xf32>
    "tpu.trace_stop"() : () -> ()
    %168 = tpu.concatenate %104, %125, %146, %167 in 2 : vector<2x8x32xf32>, vector<2x8x32xf32>, vector<2x8x32xf32>, vector<2x8x32xf32> -> vector<2x8x128xf32>
    %169 = vector.shape_cast %168 : vector<2x8x128xf32> to vector<16x128xf32>
    %170 = arith.truncf %169 : vector<16x128xf32> to vector<16x128xbf16>
    %c0_45 = arith.constant 0 : index
    %c0_46 = arith.constant 0 : index
    %171 = vector.load %arg8[%c0_45, %c0_46] : memref<128x32xbf16, #tpu.memory_space<vmem>>, vector<128x32xbf16>
    %cst_47 = arith.constant dense<0.000000e+00> : vector<16x32xf32>
    %172 = tpu.matmul %170, %171, %cst_47 {dimension_numbers = #tpu.dot_dimension_numbers<[1], [0], [0], [1], [0, 0, 1, 1], [], []>} : vector<16x128xbf16>, vector<128x32xbf16>, vector<16x32xf32> -> vector<16x32xf32>
    %173 = vector.shape_cast %172 : vector<16x32xf32> to vector<2x8x32xf32>
    %174 = arith.addf %173, %73 : vector<2x8x32xf32>
    %cst_48 = arith.constant dense<0.000000e+00> : vector<2x8xf32>
    %175 = vector.multi_reduction <add>, %174, %cst_48 [2] : vector<2x8x32xf32> to vector<2x8xf32>
    %176 = vector.shape_cast %175 : vector<2x8xf32> to vector<2x8x1xf32>
    %cst_49 = arith.constant 3.200000e+01 : f32
    %177 = vector.broadcast %cst_49 : f32 to vector<2x8x1xf32>
    %178 = arith.divf %176, %177 : vector<2x8x1xf32>
    %179 = vector.broadcast %178 : vector<2x8x1xf32> to vector<2x8x32xf32>
    %180 = arith.subf %174, %179 : vector<2x8x32xf32>
    %181 = arith.mulf %180, %180 : vector<2x8x32xf32>
    %cst_50 = arith.constant dense<0.000000e+00> : vector<2x8xf32>
    %182 = vector.multi_reduction <add>, %181, %cst_50 [2] : vector<2x8x32xf32> to vector<2x8xf32>
    %183 = vector.shape_cast %182 : vector<2x8xf32> to vector<2x8x1xf32>
    %cst_51 = arith.constant 3.200000e+01 : f32
    %184 = vector.broadcast %cst_51 : f32 to vector<2x8x1xf32>
    %185 = arith.divf %183, %184 : vector<2x8x1xf32>
    %186 = vector.broadcast %178 : vector<2x8x1xf32> to vector<2x8x32xf32>
    %187 = arith.subf %174, %186 : vector<2x8x32xf32>
    %cst_52 = arith.constant 9.99999997E-7 : f32
    %188 = vector.broadcast %cst_52 : f32 to vector<2x8x1xf32>
    %189 = arith.addf %185, %188 : vector<2x8x1xf32>
    %190 = math.rsqrt %189 : vector<2x8x1xf32>
    %191 = vector.broadcast %190 : vector<2x8x1xf32> to vector<2x8x32xf32>
    %192 = arith.mulf %187, %191 : vector<2x8x32xf32>
    %c0_53 = arith.constant 0 : index
    %c0_54 = arith.constant 0 : index
    %193 = vector.load %arg9[%c0_53, %c0_54] : memref<1x32xf32, #tpu.memory_space<vmem>>, vector<1x32xf32>
    %194 = vector.shape_cast %193 : vector<1x32xf32> to vector<1x1x32xf32>
    %195 = vector.broadcast %194 : vector<1x1x32xf32> to vector<2x8x32xf32>
    %196 = arith.mulf %192, %195 : vector<2x8x32xf32>
    %c0_55 = arith.constant 0 : index
    %c0_56 = arith.constant 0 : index
    %197 = vector.load %arg10[%c0_55, %c0_56] : memref<1x32xf32, #tpu.memory_space<vmem>>, vector<1x32xf32>
    %198 = vector.shape_cast %197 : vector<1x32xf32> to vector<1x1x32xf32>
    %199 = vector.broadcast %198 : vector<1x1x32xf32> to vector<2x8x32xf32>
    %200 = arith.addf %196, %199 : vector<2x8x32xf32>
    %201 = vector.extract_strided_slice %200 {offsets = [0, 7, 0], sizes = [2, 1, 32], strides = [1, 1, 1]} : vector<2x8x32xf32> to vector<2x1x32xf32>
    %202 = vector.shape_cast %201 : vector<2x1x32xf32> to vector<2x32xf32>
    %c0_57 = arith.constant 0 : index
    %c0_58 = arith.constant 0 : index
    %203 = vector.load %arg11[%c0_57, %c0_58] : memref<32x1xf32, #tpu.memory_space<vmem>>, vector<32x1xf32>
    %cst_59 = arith.constant dense<0.000000e+00> : vector<2x1xf32>
    %204 = tpu.matmul %202, %203, %cst_59 {dimension_numbers = #tpu.dot_dimension_numbers<[1], [0], [0], [1], [0, 0, 1, 1], [], []>} : vector<2x32xf32>, vector<32x1xf32>, vector<2x1xf32> -> vector<2x1xf32>
    %c0_60 = arith.constant 0 : index
    %c0_61 = arith.constant 0 : index
    %205 = vector.load %arg12[%c0_60, %c0_61] : memref<1x1xf32, #tpu.memory_space<vmem>>, vector<1x1xf32>
    %206 = vector.broadcast %205 : vector<1x1xf32> to vector<2x1xf32>
    %207 = arith.addf %204, %206 : vector<2x1xf32>
    %c0_62 = arith.constant 0 : index
    %c0_63 = arith.constant 0 : index
    %208 = vector.load %arg13[%c0_62, %c0_63] : memref<2x1xf32, #tpu.memory_space<vmem>>, vector<2x1xf32>
    tpu.vector_store %arg13[%c0_62, %c0_63], %207 {strides = array<i32>} : memref<2x1xf32, #tpu.memory_space<vmem>>, vector<2x1xf32>,
    return
  }
}

</mosaic_0001>

<llo_original>
// kernel: tpu_custom_call.1
$region0: #{tpu_custom_call.1}
  #allocation0 [shape = 'u32[]', space=smem, size = 0x4, offset = 0x4, fixed_abs, tag = 'smem constant byte address 0x4 - core index']
  #allocation1 [shape = 'u32[144,128]{1,0:T(1,128)}', space=vmem, size = 0x12000, scoped, tag = 'internal scratch']
  #allocation2 [shape = 'f32[1,1]{1,0:T(1,128)S(1)}', space=vmem, size = 0x200, scoped, tag = 'scoped memory for tpu_custom_call.1']
  %s0 = inlined_call_operand.vmem [shape: f32[16,12], index: 0, kind: input, shape index: {}]
  %s1 = inlined_call_operand.vmem [shape: bf16[12,32], index: 1, kind: input, shape index: {}]
  %s2 = inlined_call_operand.vmem [shape: f32[1,32], index: 2, kind: input, shape index: {}]
  %s3 = inlined_call_operand.vmem [shape: bf16[32,96], index: 3, kind: input, shape index: {}]
  %s4 = inlined_call_operand.vmem [shape: bf16[32,96], index: 4, kind: input, shape index: {}]
  %s5 = inlined_call_operand.vmem [shape: f32[1,96], index: 5, kind: input, shape index: {}]
  %s6 = inlined_call_operand.vmem [shape: f32[1,32], index: 6, kind: input, shape index: {}]
  %s7 = inlined_call_operand.vmem [shape: bf16[32,384], index: 7, kind: input, shape index: {}]
  %s8 = inlined_call_operand.vmem [shape: bf16[128,32], index: 8, kind: input, shape index: {}]
  %s9 = inlined_call_operand.vmem [shape: f32[1,32], index: 9, kind: input, shape index: {}]
  %s10 = inlined_call_operand.vmem [shape: f32[1,32], index: 10, kind: input, shape index: {}]
  %s11 = inlined_call_operand.vmem [shape: f32[32,1], index: 11, kind: input, shape index: {}]
  %s12 = inlined_call_operand.<no memory space> [shape: f32[1,1], index: 12, kind: input, shape index: {}]
  %s13 = inlined_call_operand.vmem [shape: f32[2,1], index: 13, kind: output, shape index: {}]
  %s14 = sld [smem:[#allocation0]]
  $region62: #{tpu_custom_call.1} parent=0
    _
  %s16 = ssub.s32 1, %s14
  %s17 = scalar_select 0, %s16, %s14
  %v18 = vstv %s12
  %19 = vst [vmem:[#allocation2] sm:$0x1] %v18
  // Predicated region
  $region2: #{tpu_custom_call.1} parent=0 // pred_check
    _
  $region3: #{tpu_custom_call.1} parent=0 // pred_check_branch
    %21 = sbr.rel (0) target = $region5
  $region4: #{tpu_custom_call.1} parent=0 // pred_region
    _
  $region5: #{tpu_custom_call.1} parent=0 // pred_fallthru
    _
  // Predicated region
  $region6: #{tpu_custom_call.1} parent=0 // pred_check
    _
  $region7: #{tpu_custom_call.1} parent=0 // pred_check_branch
    %23 = sbr.rel (0) target = $region9
  $region8: #{tpu_custom_call.1} parent=0 // pred_region
    _
  $region9: #{tpu_custom_call.1} parent=0 // pred_fallthru
    _
  // Predicated region
  $region10: #{tpu_custom_call.1} parent=0 // pred_check
    _
  $region11: #{tpu_custom_call.1} parent=0 // pred_check_branch
    %25 = sbr.rel (0) target = $region13
  $region12: #{tpu_custom_call.1} parent=0 // pred_region
    _
  $region13: #{tpu_custom_call.1} parent=0 // pred_fallthru
    _
  // Predicated region
  $region14: #{tpu_custom_call.1} parent=0 // pred_check
    _
  $region15: #{tpu_custom_call.1} parent=0 // pred_check_branch
    %27 = sbr.rel (0) target = $region17
  $region16: #{tpu_custom_call.1} parent=0 // pred_region
    _
  $region17: #{tpu_custom_call.1} parent=0 // pred_fallthru
    _
  // Predicated region
  $region18: #{tpu_custom_call.1} parent=0 // pred_check
    _
  $region19: #{tpu_custom_call.1} parent=0 // pred_check_branch
    %29 = sbr.rel (0) target = $region21
  $region20: #{tpu_custom_call.1} parent=0 // pred_region
    _
  $region21: #{tpu_custom_call.1} parent=0 // pred_fallthru
    _
  // Predicated region
  $region22: #{tpu_custom_call.1} parent=0 // pred_check
    _
  $region23: #{tpu_custom_call.1} parent=0 // pred_check_branch
    %31 = sbr.rel (0) target = $region25
  $region24: #{tpu_custom_call.1} parent=0 // pred_region
    _
  $region25: #{tpu_custom_call.1} parent=0 // pred_fallthru
    _
  // Predicated region
  $region26: #{tpu_custom_call.1} parent=0 // pred_check
    _
  $region27: #{tpu_custom_call.1} parent=0 // pred_check_branch
    %33 = sbr.rel (0) target = $region29
  $region28: #{tpu_custom_call.1} parent=0 // pred_region
    _
  $region29: #{tpu_custom_call.1} parent=0 // pred_fallthru
    _
  // Predicated region
  $region30: #{tpu_custom_call.1} parent=0 // pred_check
    _
  $region31: #{tpu_custom_call.1} parent=0 // pred_check_branch
    %35 = sbr.rel (0) target = $region33
  $region32: #{tpu_custom_call.1} parent=0 // pred_region
    _
  $region33: #{tpu_custom_call.1} parent=0 // pred_fallthru
    _
  // Predicated region
  $region34: #{tpu_custom_call.1} parent=0 // pred_check
    _
  $region35: #{tpu_custom_call.1} parent=0 // pred_check_branch
    %37 = sbr.rel (0) target = $region37
  $region36: #{tpu_custom_call.1} parent=0 // pred_region
    _
  $region37: #{tpu_custom_call.1} parent=0 // pred_fallthru
    _
  // Predicated region
  $region38: #{tpu_custom_call.1} parent=0 // pred_check
    _
  $region39: #{tpu_custom_call.1} parent=0 // pred_check_branch
    %39 = sbr.rel (0) target = $region41
  $region40: #{tpu_custom_call.1} parent=0 // pred_region
    _
  $region41: #{tpu_custom_call.1} parent=0 // pred_fallthru
    _
  // Predicated region
  $region42: #{tpu_custom_call.1} parent=0 // pred_check
    _
  $region43: #{tpu_custom_call.1} parent=0 // pred_check_branch
    %41 = sbr.rel (0) target = $region45
  $region44: #{tpu_custom_call.1} parent=0 // pred_region
    _
  $region45: #{tpu_custom_call.1} parent=0 // pred_fallthru
    _
  // Predicated region
  $region46: #{tpu_custom_call.1} parent=0 // pred_check
    _
  $region47: #{tpu_custom_call.1} parent=0 // pred_check_branch
    %43 = sbr.rel (0) target = $region49
  $region48: #{tpu_custom_call.1} parent=0 // pred_region
    _
  $region49: #{tpu_custom_call.1} parent=0 // pred_fallthru
    _
  // Predicated region
  $region50: #{tpu_custom_call.1} parent=0 // pred_check
    _
  $region51: #{tpu_custom_call.1} parent=0 // pred_check_branch
    %45 = sbr.rel (0) target = $region53
  $region52: #{tpu_custom_call.1} parent=0 // pred_region
    _
  $region53: #{tpu_custom_call.1} parent=0 // pred_fallthru
    _
  %v47 = vld [vmem:[%s0] sm:$0xff]
  %v48 = vld [vmem:[%s0 + $0x8] sm:$0xff]
  %v49 = vpack.c.bf16 %v48, %v47
  %v50 = vld [vmem:[%s1] sm:$0xf]
  %v51 = vld [vmem:[%s1 + $0x4] sm:$0x3]
  %v52 = vld [vmem:[%s2] sm:$0x1]
  %v54 = vlaneseq
  %v55 = vshrl.u32 %v54, 7
  %v56 = vsub.s32 0, %v55
  %v57 = vrot.slane %v52, %v56
  %v61 = vunpack.c.l.b16 %v50
  %v62 = vunpack.c.l.b16 %v51
  %v63 = vpack.c.b16 %v62, %v61
  %vm64 = vcmask 97280
  %v66 = vsel %vm64, %v49, 0
  %vm68 = vcmask 1045504
  %v70 = vsel %vm68, %v63, 0
  %72 = vmatprep.subr.bf16.mxu0 0
  %73 = vmatpush1.bf16.msra.mxu0 %v70
  %74 = vmatprep.subr.bf16.mxu0 0
  %75 = vmatpush1.bf16.msra.mxu0 0
  %76 = vmatprep.subr.bf16.mxu0 0
  %77 = vmatpush1.bf16.msra.mxu0 0
  %78 = vmatprep.subr.bf16.mxu0 0
  %79 = vmatpush1.bf16.msra.mxu0 0
  %80 = vmatprep.subr.bf16.mxu0 0
  %81 = vmatpush1.bf16.msra.mxu0 0
  %82 = vmatprep.subr.bf16.mxu0 0
  %83 = vmatpush1.bf16.msra.mxu0 0
  %84 = vmatprep.subr.bf16.mxu0 0
  %85 = vmatpush1.bf16.msra.mxu0 0
  %86 = vmatprep.subr.bf16.mxu0 0
  %87 = vmatpush1.bf16.msra.mxu0 0
  %88 = vmatprep.subr.bf16.mxu0 0
  %89 = vmatpush1.bf16.msra.mxu0 0
  %90 = vmatprep.subr.bf16.mxu0 0
  %91 = vmatpush1.bf16.msra.mxu0 0
  %92 = vmatprep.subr.bf16.mxu0 0
  %93 = vmatpush1.bf16.msra.mxu0 0
  %94 = vmatprep.subr.bf16.mxu0 0
  %95 = vmatpush1.bf16.msra.mxu0 0
  %96 = vmatprep.subr.bf16.mxu0 0
  %97 = vmatpush1.bf16.msra.mxu0 0
  %98 = vmatprep.subr.bf16.mxu0 0
  %99 = vmatpush1.bf16.msra.mxu0 0
  %100 = vmatprep.subr.bf16.mxu0 0
  %101 = vmatpush1.bf16.msra.mxu0 0
  %102 = vmatprep.subr.bf16.mxu0 0
  %103 = vmatpush1.bf16.msra.mxu0 0
  %104 = vmatprep.mubr.bf16.mxu0 0
  %105 = vmatmul.mubr.bf16.gmra.mrb[0].mxu0 %v66
  %v106 = vpop.f32.mrb[0].mxu0
  %v107 = vadd.f32 %v57, %v106
  %v108 = vpop.f32.mrb[0].mxu0
  %v109 = vpop.f32.mrb[0].mxu0
  %v110 = vadd.f32 %v57, %v109
  %v111 = vpop.f32.mrb[0].mxu0
  %112 = vdwg.mxu0
  %v113 = vmax.f32 %v107, 0.0
  %v114 = vmax.f32 %v110, 0.0
  %v115 = vpack.c.bf16 %v114, %v113
  %v116 = vld [vmem:[%s3] sm:$0xf]
  %v117 = vld [vmem:[%s3 + $0x4] sm:$0xf]
  %v118 = vld [vmem:[%s3 + $0x8] sm:$0xf]
  %v119 = vld [vmem:[%s3 + $0xc] sm:$0xf]
  %v120 = vld [vmem:[%s5] sm:$0x1]
  %v122 = vlaneseq
  %v123 = vshrl.u32 %v122, 7
  %v124 = vsub.s32 0, %v123
  %v125 = vrot.slane %v120, %v124
  %v131 = vunpack.c.l.b16 %v116
  %v132 = vunpack.c.l.b16 %v117
  %v133 = vunpack.c.l.b16 %v118
  %v134 = vunpack.c.l.b16 %v119
  %v135 = vpack.c.b16 %v132, %v131
  %v136 = vpack.c.b16 %v134, %v133
  %vm139 = vcmask 261120
  %v141 = vsel %vm139, %v115, 0
  %143 = vmatprep.subr.bf16.mxu0 0
  %144 = vmatpush1.bf16.msra.mxu0 %v135
  %145 = vmatprep.subr.bf16.mxu0 0
  %146 = vmatpush1.bf16.msra.mxu0 %v136
  %147 = vmatprep.subr.bf16.mxu0 0
  %148 = vmatpush1.bf16.msra.mxu0 0
  %149 = vmatprep.subr.bf16.mxu0 0
  %150 = vmatpush1.bf16.msra.mxu0 0
  %151 = vmatprep.subr.bf16.mxu0 0
  %152 = vmatpush1.bf16.msra.mxu0 0
  %153 = vmatprep.subr.bf16.mxu0 0
  %154 = vmatpush1.bf16.msra.mxu0 0
  %155 = vmatprep.subr.bf16.mxu0 0
  %156 = vmatpush1.bf16.msra.mxu0 0
  %157 = vmatprep.subr.bf16.mxu0 0
  %158 = vmatpush1.bf16.msra.mxu0 0
  %159 = vmatprep.subr.bf16.mxu0 0
  %160 = vmatpush1.bf16.msra.mxu0 0
  %161 = vmatprep.subr.bf16.mxu0 0
  %162 = vmatpush1.bf16.msra.mxu0 0
  %163 = vmatprep.subr.bf16.mxu0 0
  %164 = vmatpush1.bf16.msra.mxu0 0
  %165 = vmatprep.subr.bf16.mxu0 0
  %166 = vmatpush1.bf16.msra.mxu0 0
  %167 = vmatprep.subr.bf16.mxu0 0
  %168 = vmatpush1.bf16.msra.mxu0 0
  %169 = vmatprep.subr.bf16.mxu0 0
  %170 = vmatpush1.bf16.msra.mxu0 0
  %171 = vmatprep.subr.bf16.mxu0 0
  %172 = vmatpush1.bf16.msra.mxu0 0
  %173 = vmatprep.subr.bf16.mxu0 0
  %174 = vmatpush1.bf16.msra.mxu0 0
  %175 = vmatprep.mubr.bf16.mxu0 0
  %176 = vmatmul.mubr.bf16.gmra.mrb[0].mxu0 %v141
  %v177 = vpop.f32.mrb[0].mxu0
  %v178 = vadd.f32 %v125, %v177
  %v179 = vpop.f32.mrb[0].mxu0
  %v180 = vpop.f32.mrb[0].mxu0
  %v181 = vadd.f32 %v125, %v180
  %v182 = vpop.f32.mrb[0].mxu0
  %183 = vdwg.mxu0
  %v184 = vld [vmem:[%s4] sm:$0xf]
  %v185 = vld [vmem:[%s4 + $0x4] sm:$0xf]
  %v186 = vld [vmem:[%s4 + $0x8] sm:$0xf]
  %v187 = vld [vmem:[%s4 + $0xc] sm:$0xf]
  %v188 = vld [vmem:[%s6] sm:$0x1]
  %v190 = vlaneseq
  %v191 = vshrl.u32 %v190, 7
  %v192 = vsub.s32 0, %v191
  %v193 = vrot.slane %v188, %v192
  %v198 = vunpack.c.l.b16 %v184
  %v199 = vunpack.c.l.b16 %v185
  %v200 = vunpack.c.l.b16 %v186
  %v201 = vunpack.c.l.b16 %v187
  %v202 = vpack.c.b16 %v199, %v198
  %v203 = vpack.c.b16 %v201, %v200
  %v207 = vsel %vm139, 0, 0
  %209 = vmatprep.subr.bf16.mxu0 0
  %210 = vmatpush1.bf16.msra.mxu0 %v202
  %211 = vmatprep.subr.bf16.mxu0 0
  %212 = vmatpush1.bf16.msra.mxu0 %v203
  %213 = vmatprep.subr.bf16.mxu0 0
  %214 = vmatpush1.bf16.msra.mxu0 0
  %215 = vmatprep.subr.bf16.mxu0 0
  %216 = vmatpush1.bf16.msra.mxu0 0
  %217 = vmatprep.subr.bf16.mxu0 0
  %218 = vmatpush1.bf16.msra.mxu0 0
  %219 = vmatprep.subr.bf16.mxu0 0
  %220 = vmatpush1.bf16.msra.mxu0 0
  %221 = vmatprep.subr.bf16.mxu0 0
  %222 = vmatpush1.bf16.msra.mxu0 0
  %223 = vmatprep.subr.bf16.mxu0 0
  %224 = vmatpush1.bf16.msra.mxu0 0
  %225 = vmatprep.subr.bf16.mxu0 0
  %226 = vmatpush1.bf16.msra.mxu0 0
  %227 = vmatprep.subr.bf16.mxu0 0
  %228 = vmatpush1.bf16.msra.mxu0 0
  %229 = vmatprep.subr.bf16.mxu0 0
  %230 = vmatpush1.bf16.msra.mxu0 0
  %231 = vmatprep.subr.bf16.mxu0 0
  %232 = vmatpush1.bf16.msra.mxu0 0
  %233 = vmatprep.subr.bf16.mxu0 0
  %234 = vmatpush1.bf16.msra.mxu0 0
  %235 = vmatprep.subr.bf16.mxu0 0
  %236 = vmatpush1.bf16.msra.mxu0 0
  %237 = vmatprep.subr.bf16.mxu0 0
  %238 = vmatpush1.bf16.msra.mxu0 0
  %239 = vmatprep.subr.bf16.mxu0 0
  %240 = vmatpush1.bf16.msra.mxu0 0
  %241 = vmatprep.mubr.bf16.mxu0 0
  %242 = vmatmul.mubr.bf16.gmra.mrb[0].mxu0 %v207
  %v243 = vpop.f32.mrb[0].mxu0
  %v244 = vadd.f32 0.0, %v243
  %v245 = vpop.f32.mrb[0].mxu0
  %v246 = vpop.f32.mrb[0].mxu0
  %v247 = vpop.f32.mrb[0].mxu0
  %248 = vdwg.mxu0
  %v249 = vadd.f32 %v178, %v244
  %v250 = vxor.u32 %v249, 2147483648
  %v251 = vmul.f32 %v250, 1.442695
  %v252 = vpow.pop %v251
  %v253 = vadd.f32 %v252, 1.0
  %v254 = vrcp.pop %v253
  %v255 = vmul.f32 1.0, %v254
  %256 = vrot.lane.b32.xlu0 %v193, 64
  %v257 = vpop.permute.xlu0 %256
  %v259 = vadd.f32 %v244, %v257
  %261 = vrot.lane.b32.xlu0 %v259, 64
  %v262 = vpop.permute.xlu0 %261
  %v264 = vmul.f32 %v255, %v262
  %266 = vrot.lane.b32.xlu0 %v264, 64
  %v267 = vpop.permute.xlu0 %266
  %v269 = vadd.f32 %v178, %v267
  %v270 = vtanh.pop %v269
  %v271 = vsub.f32 1.0, %v255
  %273 = vrot.lane.b32.xlu0 %v270, 96
  %v274 = vpop.permute.xlu0 %273
  %v276 = vmul.f32 %v271, %v274
  %v277 = vmul.f32 %v255, 0.0
  %v278 = vadd.f32 %v276, %v277
  %v279 = vpack.c.bf16 %v278, %v278
  %281 = vrot.lane.b32.xlu0 %v279, 96
  %v282 = vpop.permute.xlu0 %281
  %v284 = vsel %vm139, %v282, 0
  %286 = vmatprep.subr.bf16.mxu0 0
  %287 = vmatpush1.bf16.msra.mxu0 %v202
  %288 = vmatprep.subr.bf16.mxu0 0
  %289 = vmatpush1.bf16.msra.mxu0 %v203
  %290 = vmatprep.subr.bf16.mxu0 0
  %291 = vmatpush1.bf16.msra.mxu0 0
  %292 = vmatprep.subr.bf16.mxu0 0
  %293 = vmatpush1.bf16.msra.mxu0 0
  %294 = vmatprep.subr.bf16.mxu0 0
  %295 = vmatpush1.bf16.msra.mxu0 0
  %296 = vmatprep.subr.bf16.mxu0 0
  %297 = vmatpush1.bf16.msra.mxu0 0
  %298 = vmatprep.subr.bf16.mxu0 0
  %299 = vmatpush1.bf16.msra.mxu0 0
  %300 = vmatprep.subr.bf16.mxu0 0
  %301 = vmatpush1.bf16.msra.mxu0 0
  %302 = vmatprep.subr.bf16.mxu0 0
  %303 = vmatpush1.bf16.msra.mxu0 0
  %304 = vmatprep.subr.bf16.mxu0 0
  %305 = vmatpush1.bf16.msra.mxu0 0
  %306 = vmatprep.subr.bf16.mxu0 0
  %307 = vmatpush1.bf16.msra.mxu0 0
  %308 = vmatprep.subr.bf16.mxu0 0
  %309 = vmatpush1.bf16.msra.mxu0 0
  %310 = vmatprep.subr.bf16.mxu0 0
  %311 = vmatpush1.bf16.msra.mxu0 0
  %312 = vmatprep.subr.bf16.mxu0 0
  %313 = vmatpush1.bf16.msra.mxu0 0
  %314 = vmatprep.subr.bf16.mxu0 0
  %315 = vmatpush1.bf16.msra.mxu0 0
  %316 = vmatprep.subr.bf16.mxu0 0
  %317 = vmatpush1.bf16.msra.mxu0 0
  %318 = vmatprep.mubr.bf16.mxu0 0
  %319 = vmatmul.mubr.bf16.gmra.mrb[0].mxu0 %v284
  %v320 = vpop.f32.mrb[0].mxu0
  %v321 = vadd.f32 0.0, %v320
  %v322 = vpop.f32.mrb[0].mxu0
  %v323 = vpop.f32.mrb[0].mxu0
  %v324 = vpop.f32.mrb[0].mxu0
  %325 = vdwg.mxu0
  %v326 = vadd.f32 %v181, %v321
  %v327 = vxor.u32 %v326, 2147483648
  %v328 = vmul.f32 %v327, 1.442695
  %v329 = vpow.pop %v328
  %v330 = vadd.f32 %v329, 1.0
  %v331 = vrcp.pop %v330
  %v332 = vmul.f32 1.0, %v331
  %v333 = vadd.f32 %v321, %v257
  %335 = vrot.lane.b32.xlu0 %v333, 64
  %v336 = vpop.permute.xlu0 %335
  %v338 = vmul.f32 %v332, %v336
  %340 = vrot.lane.b32.xlu0 %v338, 64
  %v341 = vpop.permute.xlu0 %340
  %v343 = vadd.f32 %v181, %v341
  %v344 = vtanh.pop %v343
  %v345 = vsub.f32 1.0, %v332
  %347 = vrot.lane.b32.xlu0 %v344, 96
  %v348 = vpop.permute.xlu0 %347
  %v350 = vmul.f32 %v345, %v348
  %v351 = vmul.f32 %v332, %v278
  %v352 = vadd.f32 %v350, %v351
  %v353 = vpack.c.bf16 %v352, %v278
  %v354 = vld [vmem:[%s7] sm:$0xff]
  %v355 = vld [vmem:[%s7 + $0x8] sm:$0xf]
  %v356 = vld [vmem:[%s7 + $0xc] sm:$0xff]
  %v357 = vld [vmem:[%s7 + $0x14] sm:$0xf]
  %v358 = vld [vmem:[%s7 + $0x18] sm:$0xff]
  %v359 = vld [vmem:[%s7 + $0x20] sm:$0xf]
  %v360 = vld [vmem:[%s7 + $0x24] sm:$0xff]
  %v361 = vld [vmem:[%s7 + $0x2c] sm:$0xf]
  %363 = vrot.lane.b32.xlu0 %v353, 96
  %v364 = vpop.permute.xlu0 %363
  %v373 = vunpack.c.l.b16 %v354
  %v374 = vunpack.c.h.b16 %v354
  %v375 = vunpack.c.l.b16 %v355
  %v376 = vunpack.c.l.b16 %v356
  %v377 = vunpack.c.h.b16 %v356
  %v378 = vunpack.c.l.b16 %v357
  %v379 = vunpack.c.l.b16 %v358
  %v380 = vunpack.c.h.b16 %v358
  %v381 = vunpack.c.l.b16 %v359
  %v382 = vunpack.c.l.b16 %v360
  %v383 = vunpack.c.h.b16 %v360
  %v384 = vunpack.c.l.b16 %v361
  %v385 = vpack.c.b16 %v376, %v373
  %v386 = vpack.c.b16 %v377, %v374
  %v387 = vpack.c.b16 %v378, %v375
  %v388 = vpack.c.b16 %v382, %v379
  %v389 = vpack.c.b16 %v383, %v380
  %v390 = vpack.c.b16 %v384, %v381
  %v398 = vsel %vm139, %v364, 0
  %400 = vmatprep.subr.bf16.mxu0 %v386
  %401 = vmatpush1.bf16.msra.mxu0 %v385
  %402 = vmatprep.subr.bf16.mxu0 %v389
  %403 = vmatpush1.bf16.msra.mxu0 %v388
  %404 = vmatprep.subr.bf16.mxu0 0
  %405 = vmatpush1.bf16.msra.mxu0 0
  %406 = vmatprep.subr.bf16.mxu0 0
  %407 = vmatpush1.bf16.msra.mxu0 0
  %408 = vmatprep.subr.bf16.mxu0 0
  %409 = vmatpush1.bf16.msra.mxu0 0
  %410 = vmatprep.subr.bf16.mxu0 0
  %411 = vmatpush1.bf16.msra.mxu0 0
  %412 = vmatprep.subr.bf16.mxu0 0
  %413 = vmatpush1.bf16.msra.mxu0 0
  %414 = vmatprep.subr.bf16.mxu0 0
  %415 = vmatpush1.bf16.msra.mxu0 0
  %416 = vmatprep.subr.bf16.mxu0 0
  %417 = vmatpush1.bf16.msra.mxu0 0
  %418 = vmatprep.subr.bf16.mxu0 0
  %419 = vmatpush1.bf16.msra.mxu0 0
  %420 = vmatprep.subr.bf16.mxu0 0
  %421 = vmatpush1.bf16.msra.mxu0 0
  %422 = vmatprep.subr.bf16.mxu0 0
  %423 = vmatpush1.bf16.msra.mxu0 0
  %424 = vmatprep.subr.bf16.mxu0 0
  %425 = vmatpush1.bf16.msra.mxu0 0
  %426 = vmatprep.subr.bf16.mxu0 0
  %427 = vmatpush1.bf16.msra.mxu0 0
  %428 = vmatprep.subr.bf16.mxu0 0
  %429 = vmatpush1.bf16.msra.mxu0 0
  %430 = vmatprep.subr.bf16.mxu0 0
  %431 = vmatpush1.bf16.msra.mxu0 0
  %432 = vmatprep.mubr.bf16.mxu0 0
  %433 = vmatmul.mubr.bf16.gmra.mrb[0].mxu0 %v398
  %v434 = vpop.f32.mrb[0].mxu0
  %v435 = vadd.f32 0.0, %v434
  %v436 = vpop.f32.mrb[0].mxu0
  %v437 = vadd.f32 0.0, %v436
  %v438 = vpop.f32.mrb[0].mxu0
  %v439 = vadd.f32 0.0, %v438
  %v440 = vpop.f32.mrb[0].mxu0
  %v441 = vadd.f32 0.0, %v440
  %442 = vdwg.mxu0
  %443 = vmatprep.subr.bf16.mxu0 0
  %444 = vmatpush1.bf16.msra.mxu0 %v387
  %445 = vmatprep.subr.bf16.mxu0 0
  %446 = vmatpush1.bf16.msra.mxu0 %v390
  %447 = vmatprep.subr.bf16.mxu0 0
  %448 = vmatpush1.bf16.msra.mxu0 0
  %449 = vmatprep.subr.bf16.mxu0 0
  %450 = vmatpush1.bf16.msra.mxu0 0
  %451 = vmatprep.subr.bf16.mxu0 0
  %452 = vmatpush1.bf16.msra.mxu0 0
  %453 = vmatprep.subr.bf16.mxu0 0
  %454 = vmatpush1.bf16.msra.mxu0 0
  %455 = vmatprep.subr.bf16.mxu0 0
  %456 = vmatpush1.bf16.msra.mxu0 0
  %457 = vmatprep.subr.bf16.mxu0 0
  %458 = vmatpush1.bf16.msra.mxu0 0
  %459 = vmatprep.subr.bf16.mxu0 0
  %460 = vmatpush1.bf16.msra.mxu0 0
  %461 = vmatprep.subr.bf16.mxu0 0
  %462 = vmatpush1.bf16.msra.mxu0 0
  %463 = vmatprep.subr.bf16.mxu0 0
  %464 = vmatpush1.bf16.msra.mxu0 0
  %465 = vmatprep.subr.bf16.mxu0 0
  %466 = vmatpush1.bf16.msra.mxu0 0
  %467 = vmatprep.subr.bf16.mxu0 0
  %468 = vmatpush1.bf16.msra.mxu0 0
  %469 = vmatprep.subr.bf16.mxu0 0
  %470 = vmatpush1.bf16.msra.mxu0 0
  %471 = vmatprep.subr.bf16.mxu0 0
  %472 = vmatpush1.bf16.msra.mxu0 0
  %473 = vmatprep.subr.bf16.mxu0 0
  %474 = vmatpush1.bf16.msra.mxu0 0
  %475 = vmatprep.mubr.bf16.mxu0 0
  %476 = vmatmul.mubr.bf16.gmra.mrb[0].mxu0 %v398
  %v477 = vpop.f32.mrb[0].mxu0
  %v478 = vadd.f32 0.0, %v477
  %v479 = vpop.f32.mrb[0].mxu0
  %v480 = vpop.f32.mrb[0].mxu0
  %v481 = vadd.f32 0.0, %v480
  %v482 = vpop.f32.mrb[0].mxu0
  %483 = vdwg.mxu0
  %v484 = vpack.c.bf16 %v435, %v435
  %v485 = vpack.c.bf16 %v439, %v439
  %v486 = vpack.c.bf16 %v437, %v437
  %v487 = vpack.c.bf16 %v441, %v441
  %v488 = vpack.c.bf16 %v478, %v478
  %v489 = vpack.c.bf16 %v481, %v481
  %v491 = vsel %vm139, %v484, 0
  %v494 = vsel %vm139, %v486, 0
  %496 = vmatprep.subr.bf16.mxu0 0
  %497 = vmatpush1.bf16.xpose.msra.mxu0 %v494
  %498 = vmatprep.subr.bf16.mxu0 0
  %499 = vmatpush1.bf16.xpose.msra.mxu0 0
  %500 = vmatprep.subr.bf16.mxu0 0
  %501 = vmatpush1.bf16.xpose.msra.mxu0 0
  %502 = vmatprep.subr.bf16.mxu0 0
  %503 = vmatpush1.bf16.xpose.msra.mxu0 0
  %504 = vmatprep.subr.bf16.mxu0 0
  %505 = vmatpush1.bf16.xpose.msra.mxu0 0
  %506 = vmatprep.subr.bf16.mxu0 0
  %507 = vmatpush1.bf16.xpose.msra.mxu0 0
  %508 = vmatprep.subr.bf16.mxu0 0
  %509 = vmatpush1.bf16.xpose.msra.mxu0 0
  %510 = vmatprep.subr.bf16.mxu0 0
  %511 = vmatpush1.bf16.xpose.msra.mxu0 0
  %512 = vmatprep.subr.bf16.mxu0 0
  %513 = vmatpush1.bf16.xpose.msra.mxu0 0
  %514 = vmatprep.subr.bf16.mxu0 0
  %515 = vmatpush1.bf16.xpose.msra.mxu0 0
  %516 = vmatprep.subr.bf16.mxu0 0
  %517 = vmatpush1.bf16.xpose.msra.mxu0 0
  %518 = vmatprep.subr.bf16.mxu0 0
  %519 = vmatpush1.bf16.xpose.msra.mxu0 0
  %520 = vmatprep.subr.bf16.mxu0 0
  %521 = vmatpush1.bf16.xpose.msra.mxu0 0
  %522 = vmatprep.subr.bf16.mxu0 0
  %523 = vmatpush1.bf16.xpose.msra.mxu0 0
  %524 = vmatprep.subr.bf16.mxu0 0
  %525 = vmatpush1.bf16.xpose.msra.mxu0 0
  %526 = vmatprep.subr.bf16.mxu0 0
  %527 = vmatpush1.bf16.xpose.msra.mxu0 0
  %528 = vmatprep.mubr.bf16.mxu0 0
  %529 = vmatmul.mubr.bf16.gmra.mrb[0].mxu0 %v491
  %v530 = vpop.f32.mrb[0].mxu0
  %v531 = vadd.f32 0.0, %v530
  %v532 = vpop.f32.mrb[0].mxu0
  %v533 = vpop.f32.mrb[0].mxu0
  %v534 = vpop.f32.mrb[0].mxu0
  %535 = vdwg.mxu0
  %v537 = vsel %vm139, %v485, 0
  %v540 = vsel %vm139, %v487, 0
  %542 = vmatprep.subr.bf16.mxu0 0
  %543 = vmatpush1.bf16.xpose.msra.mxu0 %v540
  %544 = vmatprep.subr.bf16.mxu0 0
  %545 = vmatpush1.bf16.xpose.msra.mxu0 0
  %546 = vmatprep.subr.bf16.mxu0 0
  %547 = vmatpush1.bf16.xpose.msra.mxu0 0
  %548 = vmatprep.subr.bf16.mxu0 0
  %549 = vmatpush1.bf16.xpose.msra.mxu0 0
  %550 = vmatprep.subr.bf16.mxu0 0
  %551 = vmatpush1.bf16.xpose.msra.mxu0 0
  %552 = vmatprep.subr.bf16.mxu0 0
  %553 = vmatpush1.bf16.xpose.msra.mxu0 0
  %554 = vmatprep.subr.bf16.mxu0 0
  %555 = vmatpush1.bf16.xpose.msra.mxu0 0
  %556 = vmatprep.subr.bf16.mxu0 0
  %557 = vmatpush1.bf16.xpose.msra.mxu0 0
  %558 = vmatprep.subr.bf16.mxu0 0
  %559 = vmatpush1.bf16.xpose.msra.mxu0 0
  %560 = vmatprep.subr.bf16.mxu0 0
  %561 = vmatpush1.bf16.xpose.msra.mxu0 0
  %562 = vmatprep.subr.bf16.mxu0 0
  %563 = vmatpush1.bf16.xpose.msra.mxu0 0
  %564 = vmatprep.subr.bf16.mxu0 0
  %565 = vmatpush1.bf16.xpose.msra.mxu0 0
  %566 = vmatprep.subr.bf16.mxu0 0
  %567 = vmatpush1.bf16.xpose.msra.mxu0 0
  %568 = vmatprep.subr.bf16.mxu0 0
  %569 = vmatpush1.bf16.xpose.msra.mxu0 0
  %570 = vmatprep.subr.bf16.mxu0 0
  %571 = vmatpush1.bf16.xpose.msra.mxu0 0
  %572 = vmatprep.subr.bf16.mxu0 0
  %573 = vmatpush1.bf16.xpose.msra.mxu0 0
  %574 = vmatprep.mubr.bf16.mxu0 0
  %575 = vmatmul.mubr.bf16.gmra.mrb[0].mxu0 %v537
  %v576 = vpop.f32.mrb[0].mxu0
  %v577 = vadd.f32 0.0, %v576
  %v578 = vpop.f32.mrb[0].mxu0
  %v579 = vpop.f32.mrb[0].mxu0
  %v580 = vpop.f32.mrb[0].mxu0
  %581 = vdwg.mxu0
  %v582 = vmul.f32 %v531, 0.17677669
  %v583 = vmul.f32 %v577, 0.17677669
  %vm584 = vcmask 64512
  %v585 = vsel %vm584, %v582, -inf
  %586 = vmax.xlane.f32.xlu0 %v585
  %v587 = vpop.xlane.xlu0 %586
  %v588 = vsel %vm584, %v583, -inf
  %589 = vmax.xlane.f32.xlu0 %v588
  %v590 = vpop.xlane.xlu0 %589
  %v591 = vsub.f32 %v582, %v587
  %v592 = vsub.f32 %v583, %v590
  %v593 = vmul.f32 %v591, 1.442695
  %v594 = vpow.pop %v593
  %v595 = vmul.f32 %v592, 1.442695
  %v596 = vpow.pop %v595
  %v597 = vsel %vm584, %v594, 0.0
  %598 = vadd.xlane.f32.xlu0 %v597
  %v599 = vpop.xlane.xlu0 %598
  %v600 = vsel %vm584, %v596, 0.0
  %601 = vadd.xlane.f32.xlu0 %v600
  %v602 = vpop.xlane.xlu0 %601
  %v603 = vrcp.pop %v599
  %v604 = vrcp.pop %v602
  %v605 = vmul.f32 %v594, %v603
  %v606 = vmul.f32 %v596, %v604
  %v607 = vpack.c.bf16 %v605, %v605
  %v608 = vpack.c.bf16 %v606, %v606
  %v610 = vsel %vm584, %v607, 0
  %vm612 = vcmask 1043456
  %v614 = vsel %vm612, %v488, 0
  %616 = vmatprep.subr.bf16.mxu0 0
  %617 = vmatpush1.bf16.msra.mxu0 %v614
  %618 = vmatprep.subr.bf16.mxu0 0
  %619 = vmatpush1.bf16.msra.mxu0 0
  %620 = vmatprep.subr.bf16.mxu0 0
  %621 = vmatpush1.bf16.msra.mxu0 0
  %622 = vmatprep.subr.bf16.mxu0 0
  %623 = vmatpush1.bf16.msra.mxu0 0
  %624 = vmatprep.subr.bf16.mxu0 0
  %625 = vmatpush1.bf16.msra.mxu0 0
  %626 = vmatprep.subr.bf16.mxu0 0
  %627 = vmatpush1.bf16.msra.mxu0 0
  %628 = vmatprep.subr.bf16.mxu0 0
  %629 = vmatpush1.bf16.msra.mxu0 0
  %630 = vmatprep.subr.bf16.mxu0 0
  %631 = vmatpush1.bf16.msra.mxu0 0
  %632 = vmatprep.subr.bf16.mxu0 0
  %633 = vmatpush1.bf16.msra.mxu0 0
  %634 = vmatprep.subr.bf16.mxu0 0
  %635 = vmatpush1.bf16.msra.mxu0 0
  %636 = vmatprep.subr.bf16.mxu0 0
  %637 = vmatpush1.bf16.msra.mxu0 0
  %638 = vmatprep.subr.bf16.mxu0 0
  %639 = vmatpush1.bf16.msra.mxu0 0
  %640 = vmatprep.subr.bf16.mxu0 0
  %641 = vmatpush1.bf16.msra.mxu0 0
  %642 = vmatprep.subr.bf16.mxu0 0
  %643 = vmatpush1.bf16.msra.mxu0 0
  %644 = vmatprep.subr.bf16.mxu0 0
  %645 = vmatpush1.bf16.msra.mxu0 0
  %646 = vmatprep.subr.bf16.mxu0 0
  %647 = vmatpush1.bf16.msra.mxu0 0
  %648 = vmatprep.mubr.bf16.mxu0 0
  %649 = vmatmul.mubr.bf16.gmra.mrb[0].mxu0 %v610
  %v650 = vpop.f32.mrb[0].mxu0
  %v651 = vadd.f32 0.0, %v650
  %v652 = vpop.f32.mrb[0].mxu0
  %v653 = vpop.f32.mrb[0].mxu0
  %v654 = vpop.f32.mrb[0].mxu0
  %655 = vdwg.mxu0
  %v657 = vsel %vm584, %v608, 0
  %v660 = vsel %vm612, %v489, 0
  %662 = vmatprep.subr.bf16.mxu0 0
  %663 = vmatpush1.bf16.msra.mxu0 %v660
  %664 = vmatprep.subr.bf16.mxu0 0
  %665 = vmatpush1.bf16.msra.mxu0 0
  %666 = vmatprep.subr.bf16.mxu0 0
  %667 = vmatpush1.bf16.msra.mxu0 0
  %668 = vmatprep.subr.bf16.mxu0 0
  %669 = vmatpush1.bf16.msra.mxu0 0
  %670 = vmatprep.subr.bf16.mxu0 0
  %671 = vmatpush1.bf16.msra.mxu0 0
  %672 = vmatprep.subr.bf16.mxu0 0
  %673 = vmatpush1.bf16.msra.mxu0 0
  %674 = vmatprep.subr.bf16.mxu0 0
  %675 = vmatpush1.bf16.msra.mxu0 0
  %676 = vmatprep.subr.bf16.mxu0 0
  %677 = vmatpush1.bf16.msra.mxu0 0
  %678 = vmatprep.subr.bf16.mxu0 0
  %679 = vmatpush1.bf16.msra.mxu0 0
  %680 = vmatprep.subr.bf16.mxu0 0
  %681 = vmatpush1.bf16.msra.mxu0 0
  %682 = vmatprep.subr.bf16.mxu0 0
  %683 = vmatpush1.bf16.msra.mxu0 0
  %684 = vmatprep.subr.bf16.mxu0 0
  %685 = vmatpush1.bf16.msra.mxu0 0
  %686 = vmatprep.subr.bf16.mxu0 0
  %687 = vmatpush1.bf16.msra.mxu0 0
  %688 = vmatprep.subr.bf16.mxu0 0
  %689 = vmatpush1.bf16.msra.mxu0 0
  %690 = vmatprep.subr.bf16.mxu0 0
  %691 = vmatpush1.bf16.msra.mxu0 0
  %692 = vmatprep.subr.bf16.mxu0 0
  %693 = vmatpush1.bf16.msra.mxu0 0
  %694 = vmatprep.mubr.bf16.mxu0 0
  %695 = vmatmul.mubr.bf16.gmra.mrb[0].mxu0 %v657
  %v696 = vpop.f32.mrb[0].mxu0
  %v697 = vadd.f32 0.0, %v696
  %v698 = vpop.f32.mrb[0].mxu0
  %v699 = vpop.f32.mrb[0].mxu0
  %v700 = vpop.f32.mrb[0].mxu0
  %701 = vdwg.mxu0
  %703 = vrot.lane.b32.xlu0 %v484, 96
  %v704 = vpop.permute.xlu0 %703
  %706 = vrot.lane.b32.xlu0 %v486, 96
  %v707 = vpop.permute.xlu0 %706
  %v709 = vsel %vm139, %v704, 0
  %v712 = vsel %vm139, %v707, 0
  %714 = vmatprep.subr.bf16.mxu0 0
  %715 = vmatpush1.bf16.xpose.msra.mxu0 %v712
  %716 = vmatprep.subr.bf16.mxu0 0
  %717 = vmatpush1.bf16.xpose.msra.mxu0 0
  %718 = vmatprep.subr.bf16.mxu0 0
  %719 = vmatpush1.bf16.xpose.msra.mxu0 0
  %720 = vmatprep.subr.bf16.mxu0 0
  %721 = vmatpush1.bf16.xpose.msra.mxu0 0
  %722 = vmatprep.subr.bf16.mxu0 0
  %723 = vmatpush1.bf16.xpose.msra.mxu0 0
  %724 = vmatprep.subr.bf16.mxu0 0
  %725 = vmatpush1.bf16.xpose.msra.mxu0 0
  %726 = vmatprep.subr.bf16.mxu0 0
  %727 = vmatpush1.bf16.xpose.msra.mxu0 0
  %728 = vmatprep.subr.bf16.mxu0 0
  %729 = vmatpush1.bf16.xpose.msra.mxu0 0
  %730 = vmatprep.subr.bf16.mxu0 0
  %731 = vmatpush1.bf16.xpose.msra.mxu0 0
  %732 = vmatprep.subr.bf16.mxu0 0
  %733 = vmatpush1.bf16.xpose.msra.mxu0 0
  %734 = vmatprep.subr.bf16.mxu0 0
  %735 = vmatpush1.bf16.xpose.msra.mxu0 0
  %736 = vmatprep.subr.bf16.mxu0 0
  %737 = vmatpush1.bf16.xpose.msra.mxu0 0
  %738 = vmatprep.subr.bf16.mxu0 0
  %739 = vmatpush1.bf16.xpose.msra.mxu0 0
  %740 = vmatprep.subr.bf16.mxu0 0
  %741 = vmatpush1.bf16.xpose.msra.mxu0 0
  %742 = vmatprep.subr.bf16.mxu0 0
  %743 = vmatpush1.bf16.xpose.msra.mxu0 0
  %744 = vmatprep.subr.bf16.mxu0 0
  %745 = vmatpush1.bf16.xpose.msra.mxu0 0
  %746 = vmatprep.mubr.bf16.mxu0 0
  %747 = vmatmul.mubr.bf16.gmra.mrb[0].mxu0 %v709
  %v748 = vpop.f32.mrb[0].mxu0
  %v749 = vadd.f32 0.0, %v748
  %v750 = vpop.f32.mrb[0].mxu0
  %v751 = vpop.f32.mrb[0].mxu0
  %v752 = vpop.f32.mrb[0].mxu0
  %753 = vdwg.mxu0
  %755 = vrot.lane.b32.xlu0 %v485, 96
  %v756 = vpop.permute.xlu0 %755
  %758 = vrot.lane.b32.xlu0 %v487, 96
  %v759 = vpop.permute.xlu0 %758
  %v761 = vsel %vm139, %v756, 0
  %v764 = vsel %vm139, %v759, 0
  %766 = vmatprep.subr.bf16.mxu0 0
  %767 = vmatpush1.bf16.xpose.msra.mxu0 %v764
  %768 = vmatprep.subr.bf16.mxu0 0
  %769 = vmatpush1.bf16.xpose.msra.mxu0 0
  %770 = vmatprep.subr.bf16.mxu0 0
  %771 = vmatpush1.bf16.xpose.msra.mxu0 0
  %772 = vmatprep.subr.bf16.mxu0 0
  %773 = vmatpush1.bf16.xpose.msra.mxu0 0
  %774 = vmatprep.subr.bf16.mxu0 0
  %775 = vmatpush1.bf16.xpose.msra.mxu0 0
  %776 = vmatprep.subr.bf16.mxu0 0
  %777 = vmatpush1.bf16.xpose.msra.mxu0 0
  %778 = vmatprep.subr.bf16.mxu0 0
  %779 = vmatpush1.bf16.xpose.msra.mxu0 0
  %780 = vmatprep.subr.bf16.mxu0 0
  %781 = vmatpush1.bf16.xpose.msra.mxu0 0
  %782 = vmatprep.subr.bf16.mxu0 0
  %783 = vmatpush1.bf16.xpose.msra.mxu0 0
  %784 = vmatprep.subr.bf16.mxu0 0
  %785 = vmatpush1.bf16.xpose.msra.mxu0 0
  %786 = vmatprep.subr.bf16.mxu0 0
  %787 = vmatpush1.bf16.xpose.msra.mxu0 0
  %788 = vmatprep.subr.bf16.mxu0 0
  %789 = vmatpush1.bf16.xpose.msra.mxu0 0
  %790 = vmatprep.subr.bf16.mxu0 0
  %791 = vmatpush1.bf16.xpose.msra.mxu0 0
  %792 = vmatprep.subr.bf16.mxu0 0
  %793 = vmatpush1.bf16.xpose.msra.mxu0 0
  %794 = vmatprep.subr.bf16.mxu0 0
  %795 = vmatpush1.bf16.xpose.msra.mxu0 0
  %796 = vmatprep.subr.bf16.mxu0 0
  %797 = vmatpush1.bf16.xpose.msra.mxu0 0
  %798 = vmatprep.mubr.bf16.mxu0 0
  %799 = vmatmul.mubr.bf16.gmra.mrb[0].mxu0 %v761
  %v800 = vpop.f32.mrb[0].mxu0
  %v801 = vadd.f32 0.0, %v800
  %v802 = vpop.f32.mrb[0].mxu0
  %v803 = vpop.f32.mrb[0].mxu0
  %v804 = vpop.f32.mrb[0].mxu0
  %805 = vdwg.mxu0
  %v806 = vmul.f32 %v749, 0.17677669
  %v807 = vmul.f32 %v801, 0.17677669
  %v808 = vsel %vm584, %v806, -inf
  %809 = vmax.xlane.f32.xlu0 %v808
  %v810 = vpop.xlane.xlu0 %809
  %v811 = vsel %vm584, %v807, -inf
  %812 = vmax.xlane.f32.xlu0 %v811
  %v813 = vpop.xlane.xlu0 %812
  %v814 = vsub.f32 %v806, %v810
  %v815 = vsub.f32 %v807, %v813
  %v816 = vmul.f32 %v814, 1.442695
  %v817 = vpow.pop %v816
  %v818 = vmul.f32 %v815, 1.442695
  %v819 = vpow.pop %v818
  %v820 = vsel %vm584, %v817, 0.0
  %821 = vadd.xlane.f32.xlu0 %v820
  %v822 = vpop.xlane.xlu0 %821
  %v823 = vsel %vm584, %v819, 0.0
  %824 = vadd.xlane.f32.xlu0 %v823
  %v825 = vpop.xlane.xlu0 %824
  %v826 = vrcp.pop %v822
  %v827 = vrcp.pop %v825
  %v828 = vmul.f32 %v817, %v826
  %v829 = vmul.f32 %v819, %v827
  %v830 = vpack.c.bf16 %v828, %v828
  %v831 = vpack.c.bf16 %v829, %v829
  %833 = vrot.lane.b32.xlu0 %v488, 96
  %v834 = vpop.permute.xlu0 %833
  %v836 = vsel %vm584, %v830, 0
  %v839 = vsel %vm612, %v834, 0
  %841 = vmatprep.subr.bf16.mxu0 0
  %842 = vmatpush1.bf16.msra.mxu0 %v839
  %843 = vmatprep.subr.bf16.mxu0 0
  %844 = vmatpush1.bf16.msra.mxu0 0
  %845 = vmatprep.subr.bf16.mxu0 0
  %846 = vmatpush1.bf16.msra.mxu0 0
  %847 = vmatprep.subr.bf16.mxu0 0
  %848 = vmatpush1.bf16.msra.mxu0 0
  %849 = vmatprep.subr.bf16.mxu0 0
  %850 = vmatpush1.bf16.msra.mxu0 0
  %851 = vmatprep.subr.bf16.mxu0 0
  %852 = vmatpush1.bf16.msra.mxu0 0
  %853 = vmatprep.subr.bf16.mxu0 0
  %854 = vmatpush1.bf16.msra.mxu0 0
  %855 = vmatprep.subr.bf16.mxu0 0
  %856 = vmatpush1.bf16.msra.mxu0 0
  %857 = vmatprep.subr.bf16.mxu0 0
  %858 = vmatpush1.bf16.msra.mxu0 0
  %859 = vmatprep.subr.bf16.mxu0 0
  %860 = vmatpush1.bf16.msra.mxu0 0
  %861 = vmatprep.subr.bf16.mxu0 0
  %862 = vmatpush1.bf16.msra.mxu0 0
  %863 = vmatprep.subr.bf16.mxu0 0
  %864 = vmatpush1.bf16.msra.mxu0 0
  %865 = vmatprep.subr.bf16.mxu0 0
  %866 = vmatpush1.bf16.msra.mxu0 0
  %867 = vmatprep.subr.bf16.mxu0 0
  %868 = vmatpush1.bf16.msra.mxu0 0
  %869 = vmatprep.subr.bf16.mxu0 0
  %870 = vmatpush1.bf16.msra.mxu0 0
  %871 = vmatprep.subr.bf16.mxu0 0
  %872 = vmatpush1.bf16.msra.mxu0 0
  %873 = vmatprep.mubr.bf16.mxu0 0
  %874 = vmatmul.mubr.bf16.gmra.mrb[0].mxu0 %v836
  %v875 = vpop.f32.mrb[0].mxu0
  %v876 = vadd.f32 0.0, %v875
  %v877 = vpop.f32.mrb[0].mxu0
  %v878 = vpop.f32.mrb[0].mxu0
  %v879 = vpop.f32.mrb[0].mxu0
  %880 = vdwg.mxu0
  %882 = vrot.lane.b32.xlu0 %v489, 96
  %v883 = vpop.permute.xlu0 %882
  %v885 = vsel %vm584, %v831, 0
  %v888 = vsel %vm612, %v883, 0
  %890 = vmatprep.subr.bf16.mxu0 0
  %891 = vmatpush1.bf16.msra.mxu0 %v888
  %892 = vmatprep.subr.bf16.mxu0 0
  %893 = vmatpush1.bf16.msra.mxu0 0
  %894 = vmatprep.subr.bf16.mxu0 0
  %895 = vmatpush1.bf16.msra.mxu0 0
  %896 = vmatprep.subr.bf16.mxu0 0
  %897 = vmatpush1.bf16.msra.mxu0 0
  %898 = vmatprep.subr.bf16.mxu0 0
  %899 = vmatpush1.bf16.msra.mxu0 0
  %900 = vmatprep.subr.bf16.mxu0 0
  %901 = vmatpush1.bf16.msra.mxu0 0
  %902 = vmatprep.subr.bf16.mxu0 0
  %903 = vmatpush1.bf16.msra.mxu0 0
  %904 = vmatprep.subr.bf16.mxu0 0
  %905 = vmatpush1.bf16.msra.mxu0 0
  %906 = vmatprep.subr.bf16.mxu0 0
  %907 = vmatpush1.bf16.msra.mxu0 0
  %908 = vmatprep.subr.bf16.mxu0 0
  %909 = vmatpush1.bf16.msra.mxu0 0
  %910 = vmatprep.subr.bf16.mxu0 0
  %911 = vmatpush1.bf16.msra.mxu0 0
  %912 = vmatprep.subr.bf16.mxu0 0
  %913 = vmatpush1.bf16.msra.mxu0 0
  %914 = vmatprep.subr.bf16.mxu0 0
  %915 = vmatpush1.bf16.msra.mxu0 0
  %916 = vmatprep.subr.bf16.mxu0 0
  %917 = vmatpush1.bf16.msra.mxu0 0
  %918 = vmatprep.subr.bf16.mxu0 0
  %919 = vmatpush1.bf16.msra.mxu0 0
  %920 = vmatprep.subr.bf16.mxu0 0
  %921 = vmatpush1.bf16.msra.mxu0 0
  %922 = vmatprep.mubr.bf16.mxu0 0
  %923 = vmatmul.mubr.bf16.gmra.mrb[0].mxu0 %v885
  %v924 = vpop.f32.mrb[0].mxu0
  %v925 = vadd.f32 0.0, %v924
  %v926 = vpop.f32.mrb[0].mxu0
  %v927 = vpop.f32.mrb[0].mxu0
  %v928 = vpop.f32.mrb[0].mxu0
  %929 = vdwg.mxu0
  %930 = vrot.lane.b32.xlu0 %v484, 64
  %v931 = vpop.permute.xlu0 %930
  %932 = vrot.lane.b32.xlu0 %v486, 64
  %v933 = vpop.permute.xlu0 %932
  %v935 = vsel %vm139, %v931, 0
  %v938 = vsel %vm139, %v933, 0
  %940 = vmatprep.subr.bf16.mxu0 0
  %941 = vmatpush1.bf16.xpose.msra.mxu0 %v938
  %942 = vmatprep.subr.bf16.mxu0 0
  %943 = vmatpush1.bf16.xpose.msra.mxu0 0
  %944 = vmatprep.subr.bf16.mxu0 0
  %945 = vmatpush1.bf16.xpose.msra.mxu0 0
  %946 = vmatprep.subr.bf16.mxu0 0
  %947 = vmatpush1.bf16.xpose.msra.mxu0 0
  %948 = vmatprep.subr.bf16.mxu0 0
  %949 = vmatpush1.bf16.xpose.msra.mxu0 0
  %950 = vmatprep.subr.bf16.mxu0 0
  %951 = vmatpush1.bf16.xpose.msra.mxu0 0
  %952 = vmatprep.subr.bf16.mxu0 0
  %953 = vmatpush1.bf16.xpose.msra.mxu0 0
  %954 = vmatprep.subr.bf16.mxu0 0
  %955 = vmatpush1.bf16.xpose.msra.mxu0 0
  %956 = vmatprep.subr.bf16.mxu0 0
  %957 = vmatpush1.bf16.xpose.msra.mxu0 0
  %958 = vmatprep.subr.bf16.mxu0 0
  %959 = vmatpush1.bf16.xpose.msra.mxu0 0
  %960 = vmatprep.subr.bf16.mxu0 0
  %961 = vmatpush1.bf16.xpose.msra.mxu0 0
  %962 = vmatprep.subr.bf16.mxu0 0
  %963 = vmatpush1.bf16.xpose.msra.mxu0 0
  %964 = vmatprep.subr.bf16.mxu0 0
  %965 = vmatpush1.bf16.xpose.msra.mxu0 0
  %966 = vmatprep.subr.bf16.mxu0 0
  %967 = vmatpush1.bf16.xpose.msra.mxu0 0
  %968 = vmatprep.subr.bf16.mxu0 0
  %969 = vmatpush1.bf16.xpose.msra.mxu0 0
  %970 = vmatprep.subr.bf16.mxu0 0
  %971 = vmatpush1.bf16.xpose.msra.mxu0 0
  %972 = vmatprep.mubr.bf16.mxu0 0
  %973 = vmatmul.mubr.bf16.gmra.mrb[0].mxu0 %v935
  %v974 = vpop.f32.mrb[0].mxu0
  %v975 = vadd.f32 0.0, %v974
  %v976 = vpop.f32.mrb[0].mxu0
  %v977 = vpop.f32.mrb[0].mxu0
  %v978 = vpop.f32.mrb[0].mxu0
  %979 = vdwg.mxu0
  %980 = vrot.lane.b32.xlu0 %v485, 64
  %v981 = vpop.permute.xlu0 %980
  %982 = vrot.lane.b32.xlu0 %v487, 64
  %v983 = vpop.permute.xlu0 %982
  %v985 = vsel %vm139, %v981, 0
  %v988 = vsel %vm139, %v983, 0
  %990 = vmatprep.subr.bf16.mxu0 0
  %991 = vmatpush1.bf16.xpose.msra.mxu0 %v988
  %992 = vmatprep.subr.bf16.mxu0 0
  %993 = vmatpush1.bf16.xpose.msra.mxu0 0
  %994 = vmatprep.subr.bf16.mxu0 0
  %995 = vmatpush1.bf16.xpose.msra.mxu0 0
  %996 = vmatprep.subr.bf16.mxu0 0
  %997 = vmatpush1.bf16.xpose.msra.mxu0 0
  %998 = vmatprep.subr.bf16.mxu0 0
  %999 = vmatpush1.bf16.xpose.msra.mxu0 0
  %1000 = vmatprep.subr.bf16.mxu0 0
  %1001 = vmatpush1.bf16.xpose.msra.mxu0 0
  %1002 = vmatprep.subr.bf16.mxu0 0
  %1003 = vmatpush1.bf16.xpose.msra.mxu0 0
  %1004 = vmatprep.subr.bf16.mxu0 0
  %1005 = vmatpush1.bf16.xpose.msra.mxu0 0
  %1006 = vmatprep.subr.bf16.mxu0 0
  %1007 = vmatpush1.bf16.xpose.msra.mxu0 0
  %1008 = vmatprep.subr.bf16.mxu0 0
  %1009 = vmatpush1.bf16.xpose.msra.mxu0 0
  %1010 = vmatprep.subr.bf16.mxu0 0
  %1011 = vmatpush1.bf16.xpose.msra.mxu0 0
  %1012 = vmatprep.subr.bf16.mxu0 0
  %1013 = vmatpush1.bf16.xpose.msra.mxu0 0
  %1014 = vmatprep.subr.bf16.mxu0 0
  %1015 = vmatpush1.bf16.xpose.msra.mxu0 0
  %1016 = vmatprep.subr.bf16.mxu0 0
  %1017 = vmatpush1.bf16.xpose.msra.mxu0 0
  %1018 = vmatprep.subr.bf16.mxu0 0
  %1019 = vmatpush1.bf16.xpose.msra.mxu0 0
  %1020 = vmatprep.subr.bf16.mxu0 0
  %1021 = vmatpush1.bf16.xpose.msra.mxu0 0
  %1022 = vmatprep.mubr.bf16.mxu0 0
  %1023 = vmatmul.mubr.bf16.gmra.mrb[0].mxu0 %v985
  %v1024 = vpop.f32.mrb[0].mxu0
  %v1025 = vadd.f32 0.0, %v1024
  %v1026 = vpop.f32.mrb[0].mxu0
  %v1027 = vpop.f32.mrb[0].mxu0
  %v1028 = vpop.f32.mrb[0].mxu0
  %1029 = vdwg.mxu0
  %v1030 = vmul.f32 %v975, 0.17677669
  %v1031 = vmul.f32 %v1025, 0.17677669
  %v1032 = vsel %vm584, %v1030, -inf
  %1033 = vmax.xlane.f32.xlu0 %v1032
  %v1034 = vpop.xlane.xlu0 %1033
  %v1035 = vsel %vm584, %v1031, -inf
  %1036 = vmax.xlane.f32.xlu0 %v1035
  %v1037 = vpop.xlane.xlu0 %1036
  %v1038 = vsub.f32 %v1030, %v1034
  %v1039 = vsub.f32 %v1031, %v1037
  %v1040 = vmul.f32 %v1038, 1.442695
  %v1041 = vpow.pop %v1040
  %v1042 = vmul.f32 %v1039, 1.442695
  %v1043 = vpow.pop %v1042
  %v1044 = vsel %vm584, %v1041, 0.0
  %1045 = vadd.xlane.f32.xlu0 %v1044
  %v1046 = vpop.xlane.xlu0 %1045
  %v1047 = vsel %vm584, %v1043, 0.0
  %1048 = vadd.xlane.f32.xlu0 %v1047
  %v1049 = vpop.xlane.xlu0 %1048
  %v1050 = vrcp.pop %v1046
  %v1051 = vrcp.pop %v1049
  %v1052 = vmul.f32 %v1041, %v1050
  %v1053 = vmul.f32 %v1043, %v1051
  %v1054 = vpack.c.bf16 %v1052, %v1052
  %v1055 = vpack.c.bf16 %v1053, %v1053
  %1056 = vrot.lane.b32.xlu0 %v488, 64
  %v1057 = vpop.permute.xlu0 %1056
  %v1059 = vsel %vm584, %v1054, 0
  %v1062 = vsel %vm612, %v1057, 0
  %1064 = vmatprep.subr.bf16.mxu0 0
  %1065 = vmatpush1.bf16.msra.mxu0 %v1062
  %1066 = vmatprep.subr.bf16.mxu0 0
  %1067 = vmatpush1.bf16.msra.mxu0 0
  %1068 = vmatprep.subr.bf16.mxu0 0
  %1069 = vmatpush1.bf16.msra.mxu0 0
  %1070 = vmatprep.subr.bf16.mxu0 0
  %1071 = vmatpush1.bf16.msra.mxu0 0
  %1072 = vmatprep.subr.bf16.mxu0 0
  %1073 = vmatpush1.bf16.msra.mxu0 0
  %1074 = vmatprep.subr.bf16.mxu0 0
  %1075 = vmatpush1.bf16.msra.mxu0 0
  %1076 = vmatprep.subr.bf16.mxu0 0
  %1077 = vmatpush1.bf16.msra.mxu0 0
  %1078 = vmatprep.subr.bf16.mxu0 0
  %1079 = vmatpush1.bf16.msra.mxu0 0
  %1080 = vmatprep.subr.bf16.mxu0 0
  %1081 = vmatpush1.bf16.msra.mxu0 0
  %1082 = vmatprep.subr.bf16.mxu0 0
  %1083 = vmatpush1.bf16.msra.mxu0 0
  %1084 = vmatprep.subr.bf16.mxu0 0
  %1085 = vmatpush1.bf16.msra.mxu0 0
  %1086 = vmatprep.subr.bf16.mxu0 0
  %1087 = vmatpush1.bf16.msra.mxu0 0
  %1088 = vmatprep.subr.bf16.mxu0 0
  %1089 = vmatpush1.bf16.msra.mxu0 0
  %1090 = vmatprep.subr.bf16.mxu0 0
  %1091 = vmatpush1.bf16.msra.mxu0 0
  %1092 = vmatprep.subr.bf16.mxu0 0
  %1093 = vmatpush1.bf16.msra.mxu0 0
  %1094 = vmatprep.subr.bf16.mxu0 0
  %1095 = vmatpush1.bf16.msra.mxu0 0
  %1096 = vmatprep.mubr.bf16.mxu0 0
  %1097 = vmatmul.mubr.bf16.gmra.mrb[0].mxu0 %v1059
  %v1098 = vpop.f32.mrb[0].mxu0
  %v1099 = vadd.f32 0.0, %v1098
  %v1100 = vpop.f32.mrb[0].mxu0
  %v1101 = vpop.f32.mrb[0].mxu0
  %v1102 = vpop.f32.mrb[0].mxu0
  %1103 = vdwg.mxu0
  %1104 = vrot.lane.b32.xlu0 %v489, 64
  %v1105 = vpop.permute.xlu0 %1104
  %v1107 = vsel %vm584, %v1055, 0
  %v1110 = vsel %vm612, %v1105, 0
  %1112 = vmatprep.subr.bf16.mxu0 0
  %1113 = vmatpush1.bf16.msra.mxu0 %v1110
  %1114 = vmatprep.subr.bf16.mxu0 0
  %1115 = vmatpush1.bf16.msra.mxu0 0
  %1116 = vmatprep.subr.bf16.mxu0 0
  %1117 = vmatpush1.bf16.msra.mxu0 0
  %1118 = vmatprep.subr.bf16.mxu0 0
  %1119 = vmatpush1.bf16.msra.mxu0 0
  %1120 = vmatprep.subr.bf16.mxu0 0
  %1121 = vmatpush1.bf16.msra.mxu0 0
  %1122 = vmatprep.subr.bf16.mxu0 0
  %1123 = vmatpush1.bf16.msra.mxu0 0
  %1124 = vmatprep.subr.bf16.mxu0 0
  %1125 = vmatpush1.bf16.msra.mxu0 0
  %1126 = vmatprep.subr.bf16.mxu0 0
  %1127 = vmatpush1.bf16.msra.mxu0 0
  %1128 = vmatprep.subr.bf16.mxu0 0
  %1129 = vmatpush1.bf16.msra.mxu0 0
  %1130 = vmatprep.subr.bf16.mxu0 0
  %1131 = vmatpush1.bf16.msra.mxu0 0
  %1132 = vmatprep.subr.bf16.mxu0 0
  %1133 = vmatpush1.bf16.msra.mxu0 0
  %1134 = vmatprep.subr.bf16.mxu0 0
  %1135 = vmatpush1.bf16.msra.mxu0 0
  %1136 = vmatprep.subr.bf16.mxu0 0
  %1137 = vmatpush1.bf16.msra.mxu0 0
  %1138 = vmatprep.subr.bf16.mxu0 0
  %1139 = vmatpush1.bf16.msra.mxu0 0
  %1140 = vmatprep.subr.bf16.mxu0 0
  %1141 = vmatpush1.bf16.msra.mxu0 0
  %1142 = vmatprep.subr.bf16.mxu0 0
  %1143 = vmatpush1.bf16.msra.mxu0 0
  %1144 = vmatprep.mubr.bf16.mxu0 0
  %1145 = vmatmul.mubr.bf16.gmra.mrb[0].mxu0 %v1107
  %v1146 = vpop.f32.mrb[0].mxu0
  %v1147 = vadd.f32 0.0, %v1146
  %v1148 = vpop.f32.mrb[0].mxu0
  %v1149 = vpop.f32.mrb[0].mxu0
  %v1150 = vpop.f32.mrb[0].mxu0
  %1151 = vdwg.mxu0
  %1152 = vrot.lane.b32.xlu0 %v484, 32
  %v1153 = vpop.permute.xlu0 %1152
  %1154 = vrot.lane.b32.xlu0 %v486, 32
  %v1155 = vpop.permute.xlu0 %1154
  %v1157 = vsel %vm139, %v1153, 0
  %v1160 = vsel %vm139, %v1155, 0
  %1162 = vmatprep.subr.bf16.mxu0 0
  %1163 = vmatpush1.bf16.xpose.msra.mxu0 %v1160
  %1164 = vmatprep.subr.bf16.mxu0 0
  %1165 = vmatpush1.bf16.xpose.msra.mxu0 0
  %1166 = vmatprep.subr.bf16.mxu0 0
  %1167 = vmatpush1.bf16.xpose.msra.mxu0 0
  %1168 = vmatprep.subr.bf16.mxu0 0
  %1169 = vmatpush1.bf16.xpose.msra.mxu0 0
  %1170 = vmatprep.subr.bf16.mxu0 0
  %1171 = vmatpush1.bf16.xpose.msra.mxu0 0
  %1172 = vmatprep.subr.bf16.mxu0 0
  %1173 = vmatpush1.bf16.xpose.msra.mxu0 0
  %1174 = vmatprep.subr.bf16.mxu0 0
  %1175 = vmatpush1.bf16.xpose.msra.mxu0 0
  %1176 = vmatprep.subr.bf16.mxu0 0
  %1177 = vmatpush1.bf16.xpose.msra.mxu0 0
  %1178 = vmatprep.subr.bf16.mxu0 0
  %1179 = vmatpush1.bf16.xpose.msra.mxu0 0
  %1180 = vmatprep.subr.bf16.mxu0 0
  %1181 = vmatpush1.bf16.xpose.msra.mxu0 0
  %1182 = vmatprep.subr.bf16.mxu0 0
  %1183 = vmatpush1.bf16.xpose.msra.mxu0 0
  %1184 = vmatprep.subr.bf16.mxu0 0
  %1185 = vmatpush1.bf16.xpose.msra.mxu0 0
  %1186 = vmatprep.subr.bf16.mxu0 0
  %1187 = vmatpush1.bf16.xpose.msra.mxu0 0
  %1188 = vmatprep.subr.bf16.mxu0 0
  %1189 = vmatpush1.bf16.xpose.msra.mxu0 0
  %1190 = vmatprep.subr.bf16.mxu0 0
  %1191 = vmatpush1.bf16.xpose.msra.mxu0 0
  %1192 = vmatprep.subr.bf16.mxu0 0
  %1193 = vmatpush1.bf16.xpose.msra.mxu0 0
  %1194 = vmatprep.mubr.bf16.mxu0 0
  %1195 = vmatmul.mubr.bf16.gmra.mrb[0].mxu0 %v1157
  %v1196 = vpop.f32.mrb[0].mxu0
  %v1197 = vadd.f32 0.0, %v1196
  %v1198 = vpop.f32.mrb[0].mxu0
  %v1199 = vpop.f32.mrb[0].mxu0
  %v1200 = vpop.f32.mrb[0].mxu0
  %1201 = vdwg.mxu0
  %1202 = vrot.lane.b32.xlu0 %v485, 32
  %v1203 = vpop.permute.xlu0 %1202
  %1204 = vrot.lane.b32.xlu0 %v487, 32
  %v1205 = vpop.permute.xlu0 %1204
  %v1207 = vsel %vm139, %v1203, 0
  %v1210 = vsel %vm139, %v1205, 0
  %1212 = vmatprep.subr.bf16.mxu0 0
  %1213 = vmatpush1.bf16.xpose.msra.mxu0 %v1210
  %1214 = vmatprep.subr.bf16.mxu0 0
  %1215 = vmatpush1.bf16.xpose.msra.mxu0 0
  %1216 = vmatprep.subr.bf16.mxu0 0
  %1217 = vmatpush1.bf16.xpose.msra.mxu0 0
  %1218 = vmatprep.subr.bf16.mxu0 0
  %1219 = vmatpush1.bf16.xpose.msra.mxu0 0
  %1220 = vmatprep.subr.bf16.mxu0 0
  %1221 = vmatpush1.bf16.xpose.msra.mxu0 0
  %1222 = vmatprep.subr.bf16.mxu0 0
  %1223 = vmatpush1.bf16.xpose.msra.mxu0 0
  %1224 = vmatprep.subr.bf16.mxu0 0
  %1225 = vmatpush1.bf16.xpose.msra.mxu0 0
  %1226 = vmatprep.subr.bf16.mxu0 0
  %1227 = vmatpush1.bf16.xpose.msra.mxu0 0
  %1228 = vmatprep.subr.bf16.mxu0 0
  %1229 = vmatpush1.bf16.xpose.msra.mxu0 0
  %1230 = vmatprep.subr.bf16.mxu0 0
  %1231 = vmatpush1.bf16.xpose.msra.mxu0 0
  %1232 = vmatprep.subr.bf16.mxu0 0
  %1233 = vmatpush1.bf16.xpose.msra.mxu0 0
  %1234 = vmatprep.subr.bf16.mxu0 0
  %1235 = vmatpush1.bf16.xpose.msra.mxu0 0
  %1236 = vmatprep.subr.bf16.mxu0 0
  %1237 = vmatpush1.bf16.xpose.msra.mxu0 0
  %1238 = vmatprep.subr.bf16.mxu0 0
  %1239 = vmatpush1.bf16.xpose.msra.mxu0 0
  %1240 = vmatprep.subr.bf16.mxu0 0
  %1241 = vmatpush1.bf16.xpose.msra.mxu0 0
  %1242 = vmatprep.subr.bf16.mxu0 0
  %1243 = vmatpush1.bf16.xpose.msra.mxu0 0
  %1244 = vmatprep.mubr.bf16.mxu0 0
  %1245 = vmatmul.mubr.bf16.gmra.mrb[0].mxu0 %v1207
  %v1246 = vpop.f32.mrb[0].mxu0
  %v1247 = vadd.f32 0.0, %v1246
  %v1248 = vpop.f32.mrb[0].mxu0
  %v1249 = vpop.f32.mrb[0].mxu0
  %v1250 = vpop.f32.mrb[0].mxu0
  %1251 = vdwg.mxu0
  %v1252 = vmul.f32 %v1197, 0.17677669
  %v1253 = vmul.f32 %v1247, 0.17677669
  %v1254 = vsel %vm584, %v1252, -inf
  %1255 = vmax.xlane.f32.xlu0 %v1254
  %v1256 = vpop.xlane.xlu0 %1255
  %v1257 = vsel %vm584, %v1253, -inf
  %1258 = vmax.xlane.f32.xlu0 %v1257
  %v1259 = vpop.xlane.xlu0 %1258
  %v1260 = vsub.f32 %v1252, %v1256
  %v1261 = vsub.f32 %v1253, %v1259
  %v1262 = vmul.f32 %v1260, 1.442695
  %v1263 = vpow.pop %v1262
  %v1264 = vmul.f32 %v1261, 1.442695
  %v1265 = vpow.pop %v1264
  %v1266 = vsel %vm584, %v1263, 0.0
  %1267 = vadd.xlane.f32.xlu0 %v1266
  %v1268 = vpop.xlane.xlu0 %1267
  %v1269 = vsel %vm584, %v1265, 0.0
  %1270 = vadd.xlane.f32.xlu0 %v1269
  %v1271 = vpop.xlane.xlu0 %1270
  %v1272 = vrcp.pop %v1268
  %v1273 = vrcp.pop %v1271
  %v1274 = vmul.f32 %v1263, %v1272
  %v1275 = vmul.f32 %v1265, %v1273
  %v1276 = vpack.c.bf16 %v1274, %v1274
  %v1277 = vpack.c.bf16 %v1275, %v1275
  %1278 = vrot.lane.b32.xlu0 %v488, 32
  %v1279 = vpop.permute.xlu0 %1278
  %v1281 = vsel %vm584, %v1276, 0
  %v1284 = vsel %vm612, %v1279, 0
  %1286 = vmatprep.subr.bf16.mxu0 0
  %1287 = vmatpush1.bf16.msra.mxu0 %v1284
  %1288 = vmatprep.subr.bf16.mxu0 0
  %1289 = vmatpush1.bf16.msra.mxu0 0
  %1290 = vmatprep.subr.bf16.mxu0 0
  %1291 = vmatpush1.bf16.msra.mxu0 0
  %1292 = vmatprep.subr.bf16.mxu0 0
  %1293 = vmatpush1.bf16.msra.mxu0 0
  %1294 = vmatprep.subr.bf16.mxu0 0
  %1295 = vmatpush1.bf16.msra.mxu0 0
  %1296 = vmatprep.subr.bf16.mxu0 0
  %1297 = vmatpush1.bf16.msra.mxu0 0
  %1298 = vmatprep.subr.bf16.mxu0 0
  %1299 = vmatpush1.bf16.msra.mxu0 0
  %1300 = vmatprep.subr.bf16.mxu0 0
  %1301 = vmatpush1.bf16.msra.mxu0 0
  %1302 = vmatprep.subr.bf16.mxu0 0
  %1303 = vmatpush1.bf16.msra.mxu0 0
  %1304 = vmatprep.subr.bf16.mxu0 0
  %1305 = vmatpush1.bf16.msra.mxu0 0
  %1306 = vmatprep.subr.bf16.mxu0 0
  %1307 = vmatpush1.bf16.msra.mxu0 0
  %1308 = vmatprep.subr.bf16.mxu0 0
  %1309 = vmatpush1.bf16.msra.mxu0 0
  %1310 = vmatprep.subr.bf16.mxu0 0
  %1311 = vmatpush1.bf16.msra.mxu0 0
  %1312 = vmatprep.subr.bf16.mxu0 0
  %1313 = vmatpush1.bf16.msra.mxu0 0
  %1314 = vmatprep.subr.bf16.mxu0 0
  %1315 = vmatpush1.bf16.msra.mxu0 0
  %1316 = vmatprep.subr.bf16.mxu0 0
  %1317 = vmatpush1.bf16.msra.mxu0 0
  %1318 = vmatprep.mubr.bf16.mxu0 0
  %1319 = vmatmul.mubr.bf16.gmra.mrb[0].mxu0 %v1281
  %v1320 = vpop.f32.mrb[0].mxu0
  %v1321 = vadd.f32 0.0, %v1320
  %v1322 = vpop.f32.mrb[0].mxu0
  %v1323 = vpop.f32.mrb[0].mxu0
  %v1324 = vpop.f32.mrb[0].mxu0
  %1325 = vdwg.mxu0
  %1326 = vrot.lane.b32.xlu0 %v489, 32
  %v1327 = vpop.permute.xlu0 %1326
  %v1329 = vsel %vm584, %v1277, 0
  %v1332 = vsel %vm612, %v1327, 0
  %1334 = vmatprep.subr.bf16.mxu0 0
  %1335 = vmatpush1.bf16.msra.mxu0 %v1332
  %1336 = vmatprep.subr.bf16.mxu0 0
  %1337 = vmatpush1.bf16.msra.mxu0 0
  %1338 = vmatprep.subr.bf16.mxu0 0
  %1339 = vmatpush1.bf16.msra.mxu0 0
  %1340 = vmatprep.subr.bf16.mxu0 0
  %1341 = vmatpush1.bf16.msra.mxu0 0
  %1342 = vmatprep.subr.bf16.mxu0 0
  %1343 = vmatpush1.bf16.msra.mxu0 0
  %1344 = vmatprep.subr.bf16.mxu0 0
  %1345 = vmatpush1.bf16.msra.mxu0 0
  %1346 = vmatprep.subr.bf16.mxu0 0
  %1347 = vmatpush1.bf16.msra.mxu0 0
  %1348 = vmatprep.subr.bf16.mxu0 0
  %1349 = vmatpush1.bf16.msra.mxu0 0
  %1350 = vmatprep.subr.bf16.mxu0 0
  %1351 = vmatpush1.bf16.msra.mxu0 0
  %1352 = vmatprep.subr.bf16.mxu0 0
  %1353 = vmatpush1.bf16.msra.mxu0 0
  %1354 = vmatprep.subr.bf16.mxu0 0
  %1355 = vmatpush1.bf16.msra.mxu0 0
  %1356 = vmatprep.subr.bf16.mxu0 0
  %1357 = vmatpush1.bf16.msra.mxu0 0
  %1358 = vmatprep.subr.bf16.mxu0 0
  %1359 = vmatpush1.bf16.msra.mxu0 0
  %1360 = vmatprep.subr.bf16.mxu0 0
  %1361 = vmatpush1.bf16.msra.mxu0 0
  %1362 = vmatprep.subr.bf16.mxu0 0
  %1363 = vmatpush1.bf16.msra.mxu0 0
  %1364 = vmatprep.subr.bf16.mxu0 0
  %1365 = vmatpush1.bf16.msra.mxu0 0
  %1366 = vmatprep.mubr.bf16.mxu0 0
  %1367 = vmatmul.mubr.bf16.gmra.mrb[0].mxu0 %v1329
  %v1368 = vpop.f32.mrb[0].mxu0
  %v1369 = vadd.f32 0.0, %v1368
  %v1370 = vpop.f32.mrb[0].mxu0
  %v1371 = vpop.f32.mrb[0].mxu0
  %v1372 = vpop.f32.mrb[0].mxu0
  %1373 = vdwg.mxu0
  %1376 = vrot.lane.b32.xlu0 %v876, 32
  %v1377 = vpop.permute.xlu0 %1376
  %1378 = vrot.lane.b32.xlu0 %v925, 32
  %v1379 = vpop.permute.xlu0 %1378
  %1384 = vrot.lane.b32.xlu0 %v1099, 64
  %v1385 = vpop.permute.xlu0 %1384
  %1386 = vrot.lane.b32.xlu0 %v1147, 64
  %v1387 = vpop.permute.xlu0 %1386
  %1392 = vrot.lane.b32.xlu0 %v1321, 96
  %v1393 = vpop.permute.xlu0 %1392
  %1394 = vrot.lane.b32.xlu0 %v1369, 96
  %v1395 = vpop.permute.xlu0 %1394
  %v1398 = vsel %vm139, %v651, %v1377
  %v1399 = vsel %vm139, %v697, %v1379
  %vm1400 = vcmask 523264
  %v1401 = vsel %vm1400, %v1398, %v1385
  %v1402 = vsel %vm1400, %v1399, %v1387
  %vm1403 = vcmask 785408
  %v1404 = vsel %vm1403, %v1401, %v1393
  %v1405 = vsel %vm1403, %v1402, %v1395
  %v1406 = vpack.c.bf16 %v1405, %v1404
  %v1407 = vld [vmem:[%s8] sm:$0xf]
  %v1408 = vld [vmem:[%s8 + $0x4] sm:$0xf]
  %v1409 = vld [vmem:[%s8 + $0x8] sm:$0xf]
  %v1410 = vld [vmem:[%s8 + $0xc] sm:$0xf]
  %v1411 = vld [vmem:[%s8 + $0x10] sm:$0xf]
  %v1412 = vld [vmem:[%s8 + $0x14] sm:$0xf]
  %v1413 = vld [vmem:[%s8 + $0x18] sm:$0xf]
  %v1414 = vld [vmem:[%s8 + $0x1c] sm:$0xf]
  %v1415 = vld [vmem:[%s8 + $0x20] sm:$0xf]
  %v1416 = vld [vmem:[%s8 + $0x24] sm:$0xf]
  %v1417 = vld [vmem:[%s8 + $0x28] sm:$0xf]
  %v1418 = vld [vmem:[%s8 + $0x2c] sm:$0xf]
  %v1419 = vld [vmem:[%s8 + $0x30] sm:$0xf]
  %v1420 = vld [vmem:[%s8 + $0x34] sm:$0xf]
  %v1421 = vld [vmem:[%s8 + $0x38] sm:$0xf]
  %v1422 = vld [vmem:[%s8 + $0x3c] sm:$0xf]
  %v1439 = vunpack.c.l.b16 %v1407
  %v1440 = vunpack.c.l.b16 %v1408
  %v1441 = vunpack.c.l.b16 %v1409
  %v1442 = vunpack.c.l.b16 %v1410
  %v1443 = vunpack.c.l.b16 %v1411
  %v1444 = vunpack.c.l.b16 %v1412
  %v1445 = vunpack.c.l.b16 %v1413
  %v1446 = vunpack.c.l.b16 %v1414
  %v1447 = vunpack.c.l.b16 %v1415
  %v1448 = vunpack.c.l.b16 %v1416
  %v1449 = vunpack.c.l.b16 %v1417
  %v1450 = vunpack.c.l.b16 %v1418
  %v1451 = vunpack.c.l.b16 %v1419
  %v1452 = vunpack.c.l.b16 %v1420
  %v1453 = vunpack.c.l.b16 %v1421
  %v1454 = vunpack.c.l.b16 %v1422
  %v1455 = vpack.c.b16 %v1440, %v1439
  %v1456 = vpack.c.b16 %v1442, %v1441
  %v1457 = vpack.c.b16 %v1444, %v1443
  %v1458 = vpack.c.b16 %v1446, %v1445
  %v1459 = vpack.c.b16 %v1448, %v1447
  %v1460 = vpack.c.b16 %v1450, %v1449
  %v1461 = vpack.c.b16 %v1452, %v1451
  %v1462 = vpack.c.b16 %v1454, %v1453
  %1471 = vmatprep.subr.bf16.mxu0 0
  %1472 = vmatpush1.bf16.msra.mxu0 %v1455
  %1473 = vmatprep.subr.bf16.mxu0 0
  %1474 = vmatpush1.bf16.msra.mxu0 %v1456
  %1475 = vmatprep.subr.bf16.mxu0 0
  %1476 = vmatpush1.bf16.msra.mxu0 %v1457
  %1477 = vmatprep.subr.bf16.mxu0 0
  %1478 = vmatpush1.bf16.msra.mxu0 %v1458
  %1479 = vmatprep.subr.bf16.mxu0 0
  %1480 = vmatpush1.bf16.msra.mxu0 %v1459
  %1481 = vmatprep.subr.bf16.mxu0 0
  %1482 = vmatpush1.bf16.msra.mxu0 %v1460
  %1483 = vmatprep.subr.bf16.mxu0 0
  %1484 = vmatpush1.bf16.msra.mxu0 %v1461
  %1485 = vmatprep.subr.bf16.mxu0 0
  %1486 = vmatpush1.bf16.msra.mxu0 %v1462
  %1487 = vmatprep.subr.bf16.mxu0 0
  %1488 = vmatpush1.bf16.msra.mxu0 0
  %1489 = vmatprep.subr.bf16.mxu0 0
  %1490 = vmatpush1.bf16.msra.mxu0 0
  %1491 = vmatprep.subr.bf16.mxu0 0
  %1492 = vmatpush1.bf16.msra.mxu0 0
  %1493 = vmatprep.subr.bf16.mxu0 0
  %1494 = vmatpush1.bf16.msra.mxu0 0
  %1495 = vmatprep.subr.bf16.mxu0 0
  %1496 = vmatpush1.bf16.msra.mxu0 0
  %1497 = vmatprep.subr.bf16.mxu0 0
  %1498 = vmatpush1.bf16.msra.mxu0 0
  %1499 = vmatprep.subr.bf16.mxu0 0
  %1500 = vmatpush1.bf16.msra.mxu0 0
  %1501 = vmatprep.subr.bf16.mxu0 0
  %1502 = vmatpush1.bf16.msra.mxu0 0
  %1503 = vmatprep.mubr.bf16.mxu0 0
  %1504 = vmatmul.mubr.bf16.gmra.mrb[0].mxu0 %v1406
  %v1505 = vpop.f32.mrb[0].mxu0
  %v1506 = vadd.f32 0.0, %v1505
  %v1507 = vpop.f32.mrb[0].mxu0
  %v1508 = vpop.f32.mrb[0].mxu0
  %v1509 = vadd.f32 0.0, %v1508
  %v1510 = vpop.f32.mrb[0].mxu0
  %1511 = vdwg.mxu0
  %1514 = vrot.lane.b32.xlu0 %v278, 96
  %v1515 = vpop.permute.xlu0 %1514
  %1516 = vrot.lane.b32.xlu0 %v352, 96
  %v1517 = vpop.permute.xlu0 %1516
  %v1520 = vadd.f32 %v1506, %v1515
  %v1521 = vadd.f32 %v1509, %v1517
  %v1522 = vsel %vm139, %v1520, 0.0
  %1523 = vadd.xlane.f32.xlu0 %v1522
  %v1524 = vpop.xlane.xlu0 %1523
  %v1525 = vsel %vm139, %v1521, 0.0
  %1526 = vadd.xlane.f32.xlu0 %v1525
  %v1527 = vpop.xlane.xlu0 %1526
  %v1528 = vrcp.pop 32.0
  %v1529 = vmul.f32 %v1524, %v1528
  %v1530 = vmul.f32 %v1527, %v1528
  %v1531 = vsub.f32 %v1520, %v1529
  %v1532 = vsub.f32 %v1521, %v1530
  %v1533 = vmul.f32 %v1531, %v1531
  %v1534 = vmul.f32 %v1532, %v1532
  %v1535 = vsel %vm139, %v1533, 0.0
  %1536 = vadd.xlane.f32.xlu0 %v1535
  %v1537 = vpop.xlane.xlu0 %1536
  %v1538 = vsel %vm139, %v1534, 0.0
  %1539 = vadd.xlane.f32.xlu0 %v1538
  %v1540 = vpop.xlane.xlu0 %1539
  %v1541 = vmul.f32 %v1537, %v1528
  %v1542 = vmul.f32 %v1540, %v1528
  %v1543 = vadd.f32 %v1541, 1e-06
  %v1544 = vadd.f32 %v1542, 1e-06
  %v1545 = vrsqrt.pop %v1543
  %v1546 = vrsqrt.pop %v1544
  %v1547 = vmul.f32 %v1531, %v1545
  %v1548 = vmul.f32 %v1532, %v1546
  %v1549 = vld [vmem:[%s9] sm:$0x1]
  %v1551 = vlaneseq
  %v1552 = vshrl.u32 %v1551, 7
  %v1553 = vsub.s32 0, %v1552
  %v1554 = vrot.slane %v1549, %v1553
  %v1556 = vmul.f32 %v1547, %v1554
  %v1557 = vmul.f32 %v1548, %v1554
  %v1558 = vld [vmem:[%s10] sm:$0x1]
  %v1560 = vlaneseq
  %v1561 = vshrl.u32 %v1560, 7
  %v1562 = vsub.s32 0, %v1561
  %v1563 = vrot.slane %v1558, %v1562
  %v1565 = vadd.f32 %v1556, %v1563
  %v1566 = vadd.f32 %v1557, %v1563
  %v1567 = vld [vmem:[%s11] sm:$0xff]
  %v1568 = vld [vmem:[%s11 + $0x8] sm:$0xff]
  %v1569 = vld [vmem:[%s11 + $0x10] sm:$0xff]
  %v1570 = vld [vmem:[%s11 + $0x18] sm:$0xff]
  %v1571 = vld [vmem:[#allocation2] sm:$0x1]
  %v1573 = vlaneseq
  %v1574 = vshrl.u32 %v1573, 7
  %v1575 = vsub.s32 0, %v1574
  %v1576 = vrot.slane %v1571, %v1575
  %v1580 = vrot.slane %v1565, 7
  %v1581 = vrot.slane %v1566, 6
  %vm1582 = vcmask 1041409
  %v1583 = vsel %vm1582, %v1581, %v1580
  %v1584 = vsel %vm139, %v1583, 0
  %1586 = vmatprep.subr.mxu0 0.0
  %1587 = vmatpush1.msra.mxu0 %v1567
  %1588 = vmatprep.subr.mxu0 0.0
  %1589 = vmatpush1.msra.mxu0 %v1568
  %1590 = vmatprep.subr.mxu0 0.0
  %1591 = vmatpush1.msra.mxu0 %v1569
  %1592 = vmatprep.subr.mxu0 0.0
  %1593 = vmatpush1.msra.mxu0 %v1570
  %1594 = vmatprep.subr.mxu0 0.0
  %1595 = vmatpush1.msra.mxu0 0.0
  %1596 = vmatprep.subr.mxu0 0.0
  %1597 = vmatpush1.msra.mxu0 0.0
  %1598 = vmatprep.subr.mxu0 0.0
  %1599 = vmatpush1.msra.mxu0 0.0
  %1600 = vmatprep.subr.mxu0 0.0
  %1601 = vmatpush1.msra.mxu0 0.0
  %1602 = vmatprep.subr.mxu0 0.0
  %1603 = vmatpush1.msra.mxu0 0.0
  %1604 = vmatprep.subr.mxu0 0.0
  %1605 = vmatpush1.msra.mxu0 0.0
  %1606 = vmatprep.subr.mxu0 0.0
  %1607 = vmatpush1.msra.mxu0 0.0
  %1608 = vmatprep.subr.mxu0 0.0
  %1609 = vmatpush1.msra.mxu0 0.0
  %1610 = vmatprep.subr.mxu0 0.0
  %1611 = vmatpush1.msra.mxu0 0.0
  %1612 = vmatprep.subr.mxu0 0.0
  %1613 = vmatpush1.msra.mxu0 0.0
  %1614 = vmatprep.subr.mxu0 0.0
  %1615 = vmatpush1.msra.mxu0 0.0
  %1616 = vmatprep.subr.mxu0 0.0
  %1617 = vmatpush1.msra.mxu0 0.0
  %1618 = vmatprep.subr.mxu0 0.0
  %1619 = vmatpush1.msra.mxu0 0.0
  %1620 = vmatprep.subr.mxu0 0.0
  %1621 = vmatpush1.msra.mxu0 0.0
  %1622 = vmatprep.subr.mxu0 0.0
  %1623 = vmatpush1.msra.mxu0 0.0
  %1624 = vmatprep.subr.mxu0 0.0
  %1625 = vmatpush1.msra.mxu0 0.0
  %1626 = vmatprep.subr.mxu0 0.0
  %1627 = vmatpush1.msra.mxu0 0.0
  %1628 = vmatprep.subr.mxu0 0.0
  %1629 = vmatpush1.msra.mxu0 0.0
  %1630 = vmatprep.subr.mxu0 0.0
  %1631 = vmatpush1.msra.mxu0 0.0
  %1632 = vmatprep.subr.mxu0 0.0
  %1633 = vmatpush1.msra.mxu0 0.0
  %1634 = vmatprep.subr.mxu0 0.0
  %1635 = vmatpush1.msra.mxu0 0.0
  %1636 = vmatprep.subr.mxu0 0.0
  %1637 = vmatpush1.msra.mxu0 0.0
  %1638 = vmatprep.subr.mxu0 0.0
  %1639 = vmatpush1.msra.mxu0 0.0
  %1640 = vmatprep.subr.mxu0 0.0
  %1641 = vmatpush1.msra.mxu0 0.0
  %1642 = vmatprep.subr.mxu0 0.0
  %1643 = vmatpush1.msra.mxu0 0.0
  %1644 = vmatprep.subr.mxu0 0.0
  %1645 = vmatpush1.msra.mxu0 0.0
  %1646 = vmatprep.subr.mxu0 0.0
  %1647 = vmatpush1.msra.mxu0 0.0
  %1648 = vmatprep.subr.mxu0 0.0
  %1649 = vmatpush1.msra.mxu0 0.0
  %1650 = vmatprep.mubr.f32.mxu0 0.0
  %1651 = vmatmul.mubr.f32.gmra.mrb[0].mxu0 %v1584
  %v1652 = vpop.f32.mrb[0].mxu0
  %v1653 = vadd.f32 %v1576, %v1652
  %v1654 = vpop.f32.mrb[0].mxu0
  %1655 = vdwg.mxu0
  %vm1656 = vcmask 1024
  %1657 = vst.msk [vmem:[%s13] sm:$0x3] %vm1656, %v1653
  // Predicated region
  $region54: #{tpu_custom_call.1} parent=0 // pred_check
    _
  $region55: #{tpu_custom_call.1} parent=0 // pred_check_branch
    %1659 = sbr.rel (0) target = $region57
  $region56: #{tpu_custom_call.1} parent=0 // pred_region
    _
  $region57: #{tpu_custom_call.1} parent=0 // pred_fallthru
    _
  // Predicated region
  $region58: #{tpu_custom_call.1} parent=0 // pred_check
    _
  $region59: #{tpu_custom_call.1} parent=0 // pred_check_branch
    %1661 = sbr.rel (0) target = $region61
  $region60: #{tpu_custom_call.1} parent=0 // pred_region
    _
  $region61: #{tpu_custom_call.1} parent=0 // pred_fallthru
    _

</llo_original>
